<compile_context>
chip_gen: v7x
topology: tpu7x:2x2x1
jax: 0.10.0
libtpu: 0.0.40
codegen_flags: <defaults>
</compile_context>

<pallas_src>
import math

import jax
import jax.numpy as jnp
from jax import lax
from jax.experimental import pallas as pl
from jax.experimental.pallas import tpu as pltpu  # noqa: F401 (kept for TPU builds)

# ---------------- model dimensions (small, consistent with the module) ------
B = 2           # batch
S = 8           # sequence length
BS = B * S      # folded rows
D = 48          # input_hidden (d_model), must be divisible by 6 heads
D_FF = 96       # hidden (feed-forward width) = 2 * d_model (AffineCoupling)
NH = 6          # attention heads (fixed to 6 in the module)
DK = D // NH    # per-head dim
LN_EPS = 1e-12
NEG_INF = -1e30


def _layernorm(v, gamma, beta):
    """Torch-style LayerNorm from the module: unbiased std, (x-mean)/(std+eps)."""
    mean = jnp.mean(v, axis=-1, keepdims=True)
    diff = v - mean
    var = jnp.sum(diff * diff, axis=-1, keepdims=True) * (1.0 / (v.shape[-1] - 1))
    std = jnp.sqrt(var)
    inv = 1.0 / (std + LN_EPS)            # divide only on the (rows, 1) shape
    return gamma * (diff * inv) + beta


def _gelu_tanh(x):
    return 0.5 * x * (1.0 + jnp.tanh(math.sqrt(2.0 / math.pi)
                                     * (x + 0.044715 * x * x * x)))


# ---------------------------- the Pallas kernel ------------------------------
def transformer_block_kernel(x_ref, wqkv_ref, wo_ref, w1_ref, w2_ref,
                             pslab_ref, o_ref):
    # x_ref: (BS, D) — both batch elements folded on the sublane axis.
    x = x_ref[...]                               # (BS, D) f32

    # Packed parameter slab (8, 3D): biases + LN gammas/betas.
    slab = pslab_ref[...]
    b_qkv = slab[0:1, :]                         # (1, 3D)
    b_1   = slab[1:2, 0:D_FF]                    # (1, D_FF)
    b_o   = slab[2:3, 0:D]                       # (1, D)
    b_2   = slab[3:4, 0:D]                       # (1, D)
    ln1_g = slab[4:5, 0:D]
    ln1_b = slab[5:6, 0:D]
    ln2_g = slab[6:7, 0:D]
    ln2_b = slab[7:8, 0:D]

    # ---------------- sublayer 1: x + MHA(LN1(x)) ----------------
    h1 = _layernorm(x, ln1_g, ln1_b)                                  # (BS, D)
    qkv = jnp.dot(h1, wqkv_ref[...],
                  preferred_element_type=jnp.float32) + b_qkv         # (BS, 3D)

    scale = 1.0 / math.sqrt(DK)
    q_all = qkv[:, 0:D] * scale                                       # (BS, D)

    # Block-diagonal additive mask so one softmax over BS keys equals the
    # per-batch softmax (cross-batch scores get -inf -> exactly 0 weight).
    ri = lax.broadcasted_iota(jnp.int32, (BS, BS), 0)
    ci = lax.broadcasted_iota(jnp.int32, (BS, BS), 1)
    same = None
    for b in range(B):
        r_in = (ri >= b * S) & (ri < (b + 1) * S)
        c_in = (ci >= b * S) & (ci < (b + 1) * S)
        blk = r_in & c_in
        same = blk if same is None else (same | blk)
    neg_mask = jnp.where(same, 0.0, NEG_INF).astype(jnp.float32)      # (BS, BS)

    wo = wo_ref[...]                                                  # (D, D)
    attn = b_o                                                        # (1, D) -> broadcasts
    for hd in range(NH):                         # static unroll over 6 heads
        q_h = q_all[:, hd * DK:(hd + 1) * DK]                         # (BS, DK)
        k_h = qkv[:, D + hd * DK:D + (hd + 1) * DK]                   # (BS, DK)
        v_h = qkv[:, 2 * D + hd * DK:2 * D + (hd + 1) * DK]           # (BS, DK)

        s = jnp.dot(q_h, k_h.T, preferred_element_type=jnp.float32) + neg_mask
        s = s - jnp.max(s, axis=-1, keepdims=True)
        p = jnp.exp(s)
        p = p * pl.reciprocal(jnp.sum(p, axis=-1, keepdims=True), approx=True)

        out_h = jnp.dot(p, v_h, preferred_element_type=jnp.float32)   # (BS, DK)
        # Fold this head straight through its Wo row block (sublane-aligned
        # slice) instead of lane-concatenating the 6 head outputs.
        attn = attn + jnp.dot(out_h, wo[hd * DK:(hd + 1) * DK, :],
                              preferred_element_type=jnp.float32)
    x1 = x + attn

    # ---------------- sublayer 2: x1 + FFN(LN2(x1)) ----------------
    h2 = _layernorm(x1, ln2_g, ln2_b)
    f1 = jnp.dot(h2, w1_ref[...], preferred_element_type=jnp.float32) + b_1
    g = _gelu_tanh(f1)
    f2 = jnp.dot(g, w2_ref[...], preferred_element_type=jnp.float32) + b_2

    o_ref[...] = x1 + f2


# ------------------------------ the wrapper ----------------------------------
def _pack_params(p):
    """Fuse QKV weights and pack all small vectors into one (8, 3D) slab."""
    w_qkv = jnp.concatenate([p["wq"], p["wk"], p["wv"]], axis=1)        # (D, 3D)
    b_qkv = jnp.concatenate([p["bq"].reshape(1, -1),
                             p["bk"].reshape(1, -1),
                             p["bv"].reshape(1, -1)], axis=1)           # (1, 3D)
    width = 3 * D

    def row(v):
        v = v.reshape(1, -1)
        return jnp.pad(v, ((0, 0), (0, width - v.shape[1])))

    slab = jnp.concatenate([
        row(b_qkv),            # row 0
        row(p["b1"]),          # row 1
        row(p["bo"]),          # row 2
        row(p["b2"]),          # row 3
        row(p["ln1_g"]),       # row 4
        row(p["ln1_b"]),       # row 5
        row(p["ln2_g"]),       # row 6
        row(p["ln2_b"]),       # row 7
    ], axis=0)                                                          # (8, 3D)
    return w_qkv, p["wo"], p["w1"], p["w2"], slab


@jax.jit
def transformer_block(x, params):
    """x: (B, S, D) float32. params: dict of pre-transposed (in, out) weights."""
    Bn, Sn, Dn = x.shape
    assert (Bn, Sn, Dn) == (B, S, D)

    w_qkv, w_o, w1, w2, slab = _pack_params(params)
    x_flat = x.reshape(Bn * Sn, Dn)

    # Single invocation, no grid: every operand lives whole in VMEM
    # (total resident footprint ~60 KB, far under scoped VMEM on all gens).
    out_flat = pl.pallas_call(
        transformer_block_kernel,
        out_shape=jax.ShapeDtypeStruct((Bn * Sn, Dn), jnp.float32),
    )(x_flat, w_qkv, w_o, w1, w2, slab)

    return out_flat.reshape(Bn, Sn, Dn)


# ---------------- pure-JAX reference (mirrors the torch forward) -------------
def transformer_block_ref(x, p):
    h = _layernorm(x, p["ln1_g"], p["ln1_b"])                # (B,S,D)
    q = h @ p["wq"] + p["bq"]
    k = h @ p["wk"] + p["bk"]
    v = h @ p["wv"] + p["bv"]
    qh = q.reshape(B, S, NH, DK).transpose(0, 2, 1, 3)        # (B,H,S,DK)
    kh = k.reshape(B, S, NH, DK).transpose(0, 2, 1, 3)
    vh = v.reshape(B, S, NH, DK).transpose(0, 2, 1, 3)
    scores = jnp.einsum("bhqd,bhkd->bhqk", qh, kh) / math.sqrt(DK)
    pattn = jax.nn.softmax(scores, axis=-1)
    ao = jnp.einsum("bhqk,bhkd->bhqd", pattn, vh)
    ao = ao.transpose(0, 2, 1, 3).reshape(B, S, D)
    x1 = x + (ao @ p["wo"] + p["bo"])

    h2 = _layernorm(x1, p["ln2_g"], p["ln2_b"])
    f1 = h2 @ p["w1"] + p["b1"]
    f2 = _gelu_tanh(f1) @ p["w2"] + p["b2"]
    return x1 + f2


def init_params(key):
    ks = jax.random.split(key, 12)

    def w(k, shape, scale=0.05):
        return (scale * jax.random.normal(k, shape)).astype(jnp.float32)

    return {
        "ln1_g": jnp.ones((1, D), jnp.float32),
        "ln1_b": jnp.zeros((1, D), jnp.float32),
        "wq": w(ks[0], (D, D)), "bq": w(ks[1], (1, D), 0.01),
        "wk": w(ks[2], (D, D)), "bk": w(ks[3], (1, D), 0.01),
        "wv": w(ks[4], (D, D)), "bv": w(ks[5], (1, D), 0.01),
        "wo": w(ks[6], (D, D)), "bo": w(ks[7], (1, D), 0.01),
        "ln2_g": jnp.ones((1, D), jnp.float32),
        "ln2_b": jnp.zeros((1, D), jnp.float32),
        "w1": w(ks[8], (D, D_FF)), "b1": w(ks[9], (1, D_FF), 0.01),
        "w2": w(ks[10], (D_FF, D)), "b2": w(ks[11], (1, D), 0.01),
    }


if __name__ == "__main__":
    key = jax.random.PRNGKey(0)
    kx, kp = jax.random.split(key)
    x = jax.random.normal(kx, (B, S, D), dtype=jnp.float32)
    params = init_params(kp)

    out = jax.block_until_ready(transformer_block(x, params))
    ref = transformer_block_ref(x, params)

    assert out.shape == (B, S, D)
    # Tolerance relaxed vs exact math because the softmax denominator uses the
    # approximate (~12-bit) EUP reciprocal; real bugs produce O(1e-2+) errors.
    err = float(jnp.max(jnp.abs(out - ref)))
    assert err < 2e-3, err

    print("KERNEL_OK")
</pallas_src>

<mosaic_0001>
module attributes {stable_mosaic.version = 11 : i64} {
  func.func @transformer_block_kernel(%arg0: memref<16x48xf32, #tpu.memory_space<vmem>>, %arg1: memref<48x144xf32, #tpu.memory_space<vmem>>, %arg2: memref<48x48xf32, #tpu.memory_space<vmem>>, %arg3: memref<48x96xf32, #tpu.memory_space<vmem>>, %arg4: memref<96x48xf32, #tpu.memory_space<vmem>>, %arg5: memref<8x144xf32, #tpu.memory_space<vmem>>, %arg6: memref<16x48xf32, #tpu.memory_space<vmem>>) attributes {dimension_semantics = [], scalar_prefetch = 0 : i64, scratch_operands = 0 : i64, tpu.core_type = #tpu.core_type<tc>} {
    %c0 = arith.constant 0 : index
    %c0_0 = arith.constant 0 : index
    %0 = vector.load %arg0[%c0, %c0_0] : memref<16x48xf32, #tpu.memory_space<vmem>>, vector<16x48xf32>
    %c0_1 = arith.constant 0 : index
    %c0_2 = arith.constant 0 : index
    %1 = vector.load %arg5[%c0_1, %c0_2] : memref<8x144xf32, #tpu.memory_space<vmem>>, vector<8x144xf32>
    %2 = vector.extract_strided_slice %1 {offsets = [0, 0], sizes = [1, 144], strides = [1, 1]} : vector<8x144xf32> to vector<1x144xf32>
    %3 = vector.extract_strided_slice %1 {offsets = [1, 0], sizes = [1, 96], strides = [1, 1]} : vector<8x144xf32> to vector<1x96xf32>
    %4 = vector.extract_strided_slice %1 {offsets = [2, 0], sizes = [1, 48], strides = [1, 1]} : vector<8x144xf32> to vector<1x48xf32>
    %5 = vector.extract_strided_slice %1 {offsets = [3, 0], sizes = [1, 48], strides = [1, 1]} : vector<8x144xf32> to vector<1x48xf32>
    %6 = vector.extract_strided_slice %1 {offsets = [4, 0], sizes = [1, 48], strides = [1, 1]} : vector<8x144xf32> to vector<1x48xf32>
    %7 = vector.extract_strided_slice %1 {offsets = [5, 0], sizes = [1, 48], strides = [1, 1]} : vector<8x144xf32> to vector<1x48xf32>
    %8 = vector.extract_strided_slice %1 {offsets = [6, 0], sizes = [1, 48], strides = [1, 1]} : vector<8x144xf32> to vector<1x48xf32>
    %9 = vector.extract_strided_slice %1 {offsets = [7, 0], sizes = [1, 48], strides = [1, 1]} : vector<8x144xf32> to vector<1x48xf32>
    %cst = arith.constant dense<0.000000e+00> : vector<16xf32>
    %10 = vector.multi_reduction <add>, %0, %cst [1] : vector<16x48xf32> to vector<16xf32>
    %11 = vector.shape_cast %10 : vector<16xf32> to vector<16x1xf32>
    %cst_3 = arith.constant 4.800000e+01 : f32
    %12 = vector.broadcast %cst_3 : f32 to vector<16x1xf32>
    %13 = arith.divf %11, %12 : vector<16x1xf32>
    %14 = vector.broadcast %13 : vector<16x1xf32> to vector<16x48xf32>
    %15 = arith.subf %0, %14 : vector<16x48xf32>
    %16 = arith.mulf %15, %15 : vector<16x48xf32>
    %cst_4 = arith.constant dense<0.000000e+00> : vector<16xf32>
    %17 = vector.multi_reduction <add>, %16, %cst_4 [1] : vector<16x48xf32> to vector<16xf32>
    %18 = vector.shape_cast %17 : vector<16xf32> to vector<16x1xf32>
    %cst_5 = arith.constant 0.0212765951 : f32
    %19 = vector.broadcast %cst_5 : f32 to vector<16x1xf32>
    %20 = arith.mulf %18, %19 : vector<16x1xf32>
    %21 = math.sqrt %20 : vector<16x1xf32>
    %cst_6 = arith.constant 9.99999996E-13 : f32
    %22 = vector.broadcast %cst_6 : f32 to vector<16x1xf32>
    %23 = arith.addf %21, %22 : vector<16x1xf32>
    %cst_7 = arith.constant 1.000000e+00 : f32
    %24 = vector.broadcast %cst_7 : f32 to vector<16x1xf32>
    %25 = arith.divf %24, %23 : vector<16x1xf32>
    %26 = vector.broadcast %25 : vector<16x1xf32> to vector<16x48xf32>
    %27 = arith.mulf %15, %26 : vector<16x48xf32>
    %28 = vector.broadcast %6 : vector<1x48xf32> to vector<16x48xf32>
    %29 = arith.mulf %28, %27 : vector<16x48xf32>
    %30 = vector.broadcast %7 : vector<1x48xf32> to vector<16x48xf32>
    %31 = arith.addf %29, %30 : vector<16x48xf32>
    %c0_8 = arith.constant 0 : index
    %c0_9 = arith.constant 0 : index
    %32 = vector.load %arg1[%c0_8, %c0_9] : memref<48x144xf32, #tpu.memory_space<vmem>>, vector<48x144xf32>
    %cst_10 = arith.constant dense<0.000000e+00> : vector<16x144xf32>
    %33 = tpu.matmul %31, %32, %cst_10 {dimension_numbers = #tpu.dot_dimension_numbers<[1], [0], [0], [1], [0, 0, 1, 1], [], []>} : vector<16x48xf32>, vector<48x144xf32>, vector<16x144xf32> -> vector<16x144xf32>
    %34 = vector.broadcast %2 : vector<1x144xf32> to vector<16x144xf32>
    %35 = arith.addf %33, %34 : vector<16x144xf32>
    %36 = vector.extract_strided_slice %35 {offsets = [0, 0], sizes = [16, 48], strides = [1, 1]} : vector<16x144xf32> to vector<16x48xf32>
    %cst_11 = arith.constant 0.353553385 : f32
    %37 = vector.broadcast %cst_11 : f32 to vector<16x48xf32>
    %38 = arith.mulf %36, %37 : vector<16x48xf32>
    %39 = tpu.iota {dimensions = array<i32: 0>} : vector<16x16xi32>
    %40 = tpu.iota {dimensions = array<i32: 1>} : vector<16x16xi32>
    %c0_i32 = arith.constant 0 : i32
    %41 = vector.broadcast %c0_i32 : i32 to vector<16x16xi32>
    %42 = arith.cmpi sge, %39, %41 : vector<16x16xi32>
    %c8_i32 = arith.constant 8 : i32
    %43 = vector.broadcast %c8_i32 : i32 to vector<16x16xi32>
    %44 = arith.cmpi slt, %39, %43 : vector<16x16xi32>
    %45 = arith.andi %42, %44 : vector<16x16xi1>
    %c0_i32_12 = arith.constant 0 : i32
    %46 = vector.broadcast %c0_i32_12 : i32 to vector<16x16xi32>
    %47 = arith.cmpi sge, %40, %46 : vector<16x16xi32>
    %c8_i32_13 = arith.constant 8 : i32
    %48 = vector.broadcast %c8_i32_13 : i32 to vector<16x16xi32>
    %49 = arith.cmpi slt, %40, %48 : vector<16x16xi32>
    %50 = arith.andi %47, %49 : vector<16x16xi1>
    %51 = arith.andi %45, %50 : vector<16x16xi1>
    %c8_i32_14 = arith.constant 8 : i32
    %52 = vector.broadcast %c8_i32_14 : i32 to vector<16x16xi32>
    %53 = arith.cmpi sge, %39, %52 : vector<16x16xi32>
    %c16_i32 = arith.constant 16 : i32
    %54 = vector.broadcast %c16_i32 : i32 to vector<16x16xi32>
    %55 = arith.cmpi slt, %39, %54 : vector<16x16xi32>
    %56 = arith.andi %53, %55 : vector<16x16xi1>
    %c8_i32_15 = arith.constant 8 : i32
    %57 = vector.broadcast %c8_i32_15 : i32 to vector<16x16xi32>
    %58 = arith.cmpi sge, %40, %57 : vector<16x16xi32>
    %c16_i32_16 = arith.constant 16 : i32
    %59 = vector.broadcast %c16_i32_16 : i32 to vector<16x16xi32>
    %60 = arith.cmpi slt, %40, %59 : vector<16x16xi32>
    %61 = arith.andi %58, %60 : vector<16x16xi1>
    %62 = arith.andi %56, %61 : vector<16x16xi1>
    %63 = arith.ori %51, %62 : vector<16x16xi1>
    %cst_17 = arith.constant 0.000000e+00 : f32
    %cst_18 = arith.constant -1.000000e+30 : f32
    %64 = vector.broadcast %cst_17 : f32 to vector<16x16xf32>
    %65 = vector.broadcast %cst_18 : f32 to vector<16x16xf32>
    %66 = arith.select %63, %64, %65 : vector<16x16xi1>, vector<16x16xf32>
    %c0_19 = arith.constant 0 : index
    %c0_20 = arith.constant 0 : index
    %67 = vector.load %arg2[%c0_19, %c0_20] : memref<48x48xf32, #tpu.memory_space<vmem>>, vector<48x48xf32>
    %68 = vector.extract_strided_slice %38 {offsets = [0, 0], sizes = [16, 8], strides = [1, 1]} : vector<16x48xf32> to vector<16x8xf32>
    %69 = vector.extract_strided_slice %35 {offsets = [0, 48], sizes = [16, 8], strides = [1, 1]} : vector<16x144xf32> to vector<16x8xf32>
    %70 = vector.extract_strided_slice %35 {offsets = [0, 96], sizes = [16, 8], strides = [1, 1]} : vector<16x144xf32> to vector<16x8xf32>
    %71 = tpu.transpose %69, [1, 0] : vector<16x8xf32> -> vector<8x16xf32>
    %cst_21 = arith.constant dense<0.000000e+00> : vector<16x16xf32>
    %72 = tpu.matmul %68, %71, %cst_21 {dimension_numbers = #tpu.dot_dimension_numbers<[1], [0], [0], [1], [0, 0, 1, 1], [], []>} : vector<16x8xf32>, vector<8x16xf32>, vector<16x16xf32> -> vector<16x16xf32>
    %73 = arith.addf %72, %66 : vector<16x16xf32>
    %cst_22 = arith.constant dense<0xFF800000> : vector<16xf32>
    %74 = vector.multi_reduction <maximumf>, %73, %cst_22 [1] : vector<16x16xf32> to vector<16xf32>
    %75 = vector.shape_cast %74 : vector<16xf32> to vector<16x1xf32>
    %76 = vector.broadcast %75 : vector<16x1xf32> to vector<16x16xf32>
    %77 = arith.subf %73, %76 : vector<16x16xf32>
    %78 = math.exp %77 : vector<16x16xf32>
    %cst_23 = arith.constant dense<0.000000e+00> : vector<16xf32>
    %79 = vector.multi_reduction <add>, %78, %cst_23 [1] : vector<16x16xf32> to vector<16xf32>
    %80 = vector.shape_cast %79 : vector<16xf32> to vector<16x1xf32>
    %81 = tpu.reciprocal %80 {approx = true} : vector<16x1xf32> -> vector<16x1xf32>
    %82 = vector.broadcast %81 : vector<16x1xf32> to vector<16x16xf32>
    %83 = arith.mulf %78, %82 : vector<16x16xf32>
    %cst_24 = arith.constant dense<0.000000e+00> : vector<16x8xf32>
    %84 = tpu.matmul %83, %70, %cst_24 {dimension_numbers = #tpu.dot_dimension_numbers<[1], [0], [0], [1], [0, 0, 1, 1], [], []>} : vector<16x16xf32>, vector<16x8xf32>, vector<16x8xf32> -> vector<16x8xf32>
    %85 = vector.extract_strided_slice %67 {offsets = [0, 0], sizes = [8, 48], strides = [1, 1]} : vector<48x48xf32> to vector<8x48xf32>
    %cst_25 = arith.constant dense<0.000000e+00> : vector<16x48xf32>
    %86 = tpu.matmul %84, %85, %cst_25 {dimension_numbers = #tpu.dot_dimension_numbers<[1], [0], [0], [1], [0, 0, 1, 1], [], []>} : vector<16x8xf32>, vector<8x48xf32>, vector<16x48xf32> -> vector<16x48xf32>
    %87 = vector.broadcast %4 : vector<1x48xf32> to vector<16x48xf32>
    %88 = arith.addf %87, %86 : vector<16x48xf32>
    %89 = vector.extract_strided_slice %38 {offsets = [0, 8], sizes = [16, 8], strides = [1, 1]} : vector<16x48xf32> to vector<16x8xf32>
    %90 = vector.extract_strided_slice %35 {offsets = [0, 56], sizes = [16, 8], strides = [1, 1]} : vector<16x144xf32> to vector<16x8xf32>
    %91 = vector.extract_strided_slice %35 {offsets = [0, 104], sizes = [16, 8], strides = [1, 1]} : vector<16x144xf32> to vector<16x8xf32>
    %92 = tpu.transpose %90, [1, 0] : vector<16x8xf32> -> vector<8x16xf32>
    %cst_26 = arith.constant dense<0.000000e+00> : vector<16x16xf32>
    %93 = tpu.matmul %89, %92, %cst_26 {dimension_numbers = #tpu.dot_dimension_numbers<[1], [0], [0], [1], [0, 0, 1, 1], [], []>} : vector<16x8xf32>, vector<8x16xf32>, vector<16x16xf32> -> vector<16x16xf32>
    %94 = arith.addf %93, %66 : vector<16x16xf32>
    %cst_27 = arith.constant dense<0xFF800000> : vector<16xf32>
    %95 = vector.multi_reduction <maximumf>, %94, %cst_27 [1] : vector<16x16xf32> to vector<16xf32>
    %96 = vector.shape_cast %95 : vector<16xf32> to vector<16x1xf32>
    %97 = vector.broadcast %96 : vector<16x1xf32> to vector<16x16xf32>
    %98 = arith.subf %94, %97 : vector<16x16xf32>
    %99 = math.exp %98 : vector<16x16xf32>
    %cst_28 = arith.constant dense<0.000000e+00> : vector<16xf32>
    %100 = vector.multi_reduction <add>, %99, %cst_28 [1] : vector<16x16xf32> to vector<16xf32>
    %101 = vector.shape_cast %100 : vector<16xf32> to vector<16x1xf32>
    %102 = tpu.reciprocal %101 {approx = true} : vector<16x1xf32> -> vector<16x1xf32>
    %103 = vector.broadcast %102 : vector<16x1xf32> to vector<16x16xf32>
    %104 = arith.mulf %99, %103 : vector<16x16xf32>
    %cst_29 = arith.constant dense<0.000000e+00> : vector<16x8xf32>
    %105 = tpu.matmul %104, %91, %cst_29 {dimension_numbers = #tpu.dot_dimension_numbers<[1], [0], [0], [1], [0, 0, 1, 1], [], []>} : vector<16x16xf32>, vector<16x8xf32>, vector<16x8xf32> -> vector<16x8xf32>
    %106 = vector.extract_strided_slice %67 {offsets = [8, 0], sizes = [8, 48], strides = [1, 1]} : vector<48x48xf32> to vector<8x48xf32>
    %cst_30 = arith.constant dense<0.000000e+00> : vector<16x48xf32>
    %107 = tpu.matmul %105, %106, %cst_30 {dimension_numbers = #tpu.dot_dimension_numbers<[1], [0], [0], [1], [0, 0, 1, 1], [], []>} : vector<16x8xf32>, vector<8x48xf32>, vector<16x48xf32> -> vector<16x48xf32>
    %108 = arith.addf %88, %107 : vector<16x48xf32>
    %109 = vector.extract_strided_slice %38 {offsets = [0, 16], sizes = [16, 8], strides = [1, 1]} : vector<16x48xf32> to vector<16x8xf32>
    %110 = vector.extract_strided_slice %35 {offsets = [0, 64], sizes = [16, 8], strides = [1, 1]} : vector<16x144xf32> to vector<16x8xf32>
    %111 = vector.extract_strided_slice %35 {offsets = [0, 112], sizes = [16, 8], strides = [1, 1]} : vector<16x144xf32> to vector<16x8xf32>
    %112 = tpu.transpose %110, [1, 0] : vector<16x8xf32> -> vector<8x16xf32>
    %cst_31 = arith.constant dense<0.000000e+00> : vector<16x16xf32>
    %113 = tpu.matmul %109, %112, %cst_31 {dimension_numbers = #tpu.dot_dimension_numbers<[1], [0], [0], [1], [0, 0, 1, 1], [], []>} : vector<16x8xf32>, vector<8x16xf32>, vector<16x16xf32> -> vector<16x16xf32>
    %114 = arith.addf %113, %66 : vector<16x16xf32>
    %cst_32 = arith.constant dense<0xFF800000> : vector<16xf32>
    %115 = vector.multi_reduction <maximumf>, %114, %cst_32 [1] : vector<16x16xf32> to vector<16xf32>
    %116 = vector.shape_cast %115 : vector<16xf32> to vector<16x1xf32>
    %117 = vector.broadcast %116 : vector<16x1xf32> to vector<16x16xf32>
    %118 = arith.subf %114, %117 : vector<16x16xf32>
    %119 = math.exp %118 : vector<16x16xf32>
    %cst_33 = arith.constant dense<0.000000e+00> : vector<16xf32>
    %120 = vector.multi_reduction <add>, %119, %cst_33 [1] : vector<16x16xf32> to vector<16xf32>
    %121 = vector.shape_cast %120 : vector<16xf32> to vector<16x1xf32>
    %122 = tpu.reciprocal %121 {approx = true} : vector<16x1xf32> -> vector<16x1xf32>
    %123 = vector.broadcast %122 : vector<16x1xf32> to vector<16x16xf32>
    %124 = arith.mulf %119, %123 : vector<16x16xf32>
    %cst_34 = arith.constant dense<0.000000e+00> : vector<16x8xf32>
    %125 = tpu.matmul %124, %111, %cst_34 {dimension_numbers = #tpu.dot_dimension_numbers<[1], [0], [0], [1], [0, 0, 1, 1], [], []>} : vector<16x16xf32>, vector<16x8xf32>, vector<16x8xf32> -> vector<16x8xf32>
    %126 = vector.extract_strided_slice %67 {offsets = [16, 0], sizes = [8, 48], strides = [1, 1]} : vector<48x48xf32> to vector<8x48xf32>
    %cst_35 = arith.constant dense<0.000000e+00> : vector<16x48xf32>
    %127 = tpu.matmul %125, %126, %cst_35 {dimension_numbers = #tpu.dot_dimension_numbers<[1], [0], [0], [1], [0, 0, 1, 1], [], []>} : vector<16x8xf32>, vector<8x48xf32>, vector<16x48xf32> -> vector<16x48xf32>
    %128 = arith.addf %108, %127 : vector<16x48xf32>
    %129 = vector.extract_strided_slice %38 {offsets = [0, 24], sizes = [16, 8], strides = [1, 1]} : vector<16x48xf32> to vector<16x8xf32>
    %130 = vector.extract_strided_slice %35 {offsets = [0, 72], sizes = [16, 8], strides = [1, 1]} : vector<16x144xf32> to vector<16x8xf32>
    %131 = vector.extract_strided_slice %35 {offsets = [0, 120], sizes = [16, 8], strides = [1, 1]} : vector<16x144xf32> to vector<16x8xf32>
    %132 = tpu.transpose %130, [1, 0] : vector<16x8xf32> -> vector<8x16xf32>
    %cst_36 = arith.constant dense<0.000000e+00> : vector<16x16xf32>
    %133 = tpu.matmul %129, %132, %cst_36 {dimension_numbers = #tpu.dot_dimension_numbers<[1], [0], [0], [1], [0, 0, 1, 1], [], []>} : vector<16x8xf32>, vector<8x16xf32>, vector<16x16xf32> -> vector<16x16xf32>
    %134 = arith.addf %133, %66 : vector<16x16xf32>
    %cst_37 = arith.constant dense<0xFF800000> : vector<16xf32>
    %135 = vector.multi_reduction <maximumf>, %134, %cst_37 [1] : vector<16x16xf32> to vector<16xf32>
    %136 = vector.shape_cast %135 : vector<16xf32> to vector<16x1xf32>
    %137 = vector.broadcast %136 : vector<16x1xf32> to vector<16x16xf32>
    %138 = arith.subf %134, %137 : vector<16x16xf32>
    %139 = math.exp %138 : vector<16x16xf32>
    %cst_38 = arith.constant dense<0.000000e+00> : vector<16xf32>
    %140 = vector.multi_reduction <add>, %139, %cst_38 [1] : vector<16x16xf32> to vector<16xf32>
    %141 = vector.shape_cast %140 : vector<16xf32> to vector<16x1xf32>
    %142 = tpu.reciprocal %141 {approx = true} : vector<16x1xf32> -> vector<16x1xf32>
    %143 = vector.broadcast %142 : vector<16x1xf32> to vector<16x16xf32>
    %144 = arith.mulf %139, %143 : vector<16x16xf32>
    %cst_39 = arith.constant dense<0.000000e+00> : vector<16x8xf32>
    %145 = tpu.matmul %144, %131, %cst_39 {dimension_numbers = #tpu.dot_dimension_numbers<[1], [0], [0], [1], [0, 0, 1, 1], [], []>} : vector<16x16xf32>, vector<16x8xf32>, vector<16x8xf32> -> vector<16x8xf32>
    %146 = vector.extract_strided_slice %67 {offsets = [24, 0], sizes = [8, 48], strides = [1, 1]} : vector<48x48xf32> to vector<8x48xf32>
    %cst_40 = arith.constant dense<0.000000e+00> : vector<16x48xf32>
    %147 = tpu.matmul %145, %146, %cst_40 {dimension_numbers = #tpu.dot_dimension_numbers<[1], [0], [0], [1], [0, 0, 1, 1], [], []>} : vector<16x8xf32>, vector<8x48xf32>, vector<16x48xf32> -> vector<16x48xf32>
    %148 = arith.addf %128, %147 : vector<16x48xf32>
    %149 = vector.extract_strided_slice %38 {offsets = [0, 32], sizes = [16, 8], strides = [1, 1]} : vector<16x48xf32> to vector<16x8xf32>
    %150 = vector.extract_strided_slice %35 {offsets = [0, 80], sizes = [16, 8], strides = [1, 1]} : vector<16x144xf32> to vector<16x8xf32>
    %151 = vector.extract_strided_slice %35 {offsets = [0, 128], sizes = [16, 8], strides = [1, 1]} : vector<16x144xf32> to vector<16x8xf32>
    %152 = tpu.transpose %150, [1, 0] : vector<16x8xf32> -> vector<8x16xf32>
    %cst_41 = arith.constant dense<0.000000e+00> : vector<16x16xf32>
    %153 = tpu.matmul %149, %152, %cst_41 {dimension_numbers = #tpu.dot_dimension_numbers<[1], [0], [0], [1], [0, 0, 1, 1], [], []>} : vector<16x8xf32>, vector<8x16xf32>, vector<16x16xf32> -> vector<16x16xf32>
    %154 = arith.addf %153, %66 : vector<16x16xf32>
    %cst_42 = arith.constant dense<0xFF800000> : vector<16xf32>
    %155 = vector.multi_reduction <maximumf>, %154, %cst_42 [1] : vector<16x16xf32> to vector<16xf32>
    %156 = vector.shape_cast %155 : vector<16xf32> to vector<16x1xf32>
    %157 = vector.broadcast %156 : vector<16x1xf32> to vector<16x16xf32>
    %158 = arith.subf %154, %157 : vector<16x16xf32>
    %159 = math.exp %158 : vector<16x16xf32>
    %cst_43 = arith.constant dense<0.000000e+00> : vector<16xf32>
    %160 = vector.multi_reduction <add>, %159, %cst_43 [1] : vector<16x16xf32> to vector<16xf32>
    %161 = vector.shape_cast %160 : vector<16xf32> to vector<16x1xf32>
    %162 = tpu.reciprocal %161 {approx = true} : vector<16x1xf32> -> vector<16x1xf32>
    %163 = vector.broadcast %162 : vector<16x1xf32> to vector<16x16xf32>
    %164 = arith.mulf %159, %163 : vector<16x16xf32>
    %cst_44 = arith.constant dense<0.000000e+00> : vector<16x8xf32>
    %165 = tpu.matmul %164, %151, %cst_44 {dimension_numbers = #tpu.dot_dimension_numbers<[1], [0], [0], [1], [0, 0, 1, 1], [], []>} : vector<16x16xf32>, vector<16x8xf32>, vector<16x8xf32> -> vector<16x8xf32>
    %166 = vector.extract_strided_slice %67 {offsets = [32, 0], sizes = [8, 48], strides = [1, 1]} : vector<48x48xf32> to vector<8x48xf32>
    %cst_45 = arith.constant dense<0.000000e+00> : vector<16x48xf32>
    %167 = tpu.matmul %165, %166, %cst_45 {dimension_numbers = #tpu.dot_dimension_numbers<[1], [0], [0], [1], [0, 0, 1, 1], [], []>} : vector<16x8xf32>, vector<8x48xf32>, vector<16x48xf32> -> vector<16x48xf32>
    %168 = arith.addf %148, %167 : vector<16x48xf32>
    %169 = vector.extract_strided_slice %38 {offsets = [0, 40], sizes = [16, 8], strides = [1, 1]} : vector<16x48xf32> to vector<16x8xf32>
    %170 = vector.extract_strided_slice %35 {offsets = [0, 88], sizes = [16, 8], strides = [1, 1]} : vector<16x144xf32> to vector<16x8xf32>
    %171 = vector.extract_strided_slice %35 {offsets = [0, 136], sizes = [16, 8], strides = [1, 1]} : vector<16x144xf32> to vector<16x8xf32>
    %172 = tpu.transpose %170, [1, 0] : vector<16x8xf32> -> vector<8x16xf32>
    %cst_46 = arith.constant dense<0.000000e+00> : vector<16x16xf32>
    %173 = tpu.matmul %169, %172, %cst_46 {dimension_numbers = #tpu.dot_dimension_numbers<[1], [0], [0], [1], [0, 0, 1, 1], [], []>} : vector<16x8xf32>, vector<8x16xf32>, vector<16x16xf32> -> vector<16x16xf32>
    %174 = arith.addf %173, %66 : vector<16x16xf32>
    %cst_47 = arith.constant dense<0xFF800000> : vector<16xf32>
    %175 = vector.multi_reduction <maximumf>, %174, %cst_47 [1] : vector<16x16xf32> to vector<16xf32>
    %176 = vector.shape_cast %175 : vector<16xf32> to vector<16x1xf32>
    %177 = vector.broadcast %176 : vector<16x1xf32> to vector<16x16xf32>
    %178 = arith.subf %174, %177 : vector<16x16xf32>
    %179 = math.exp %178 : vector<16x16xf32>
    %cst_48 = arith.constant dense<0.000000e+00> : vector<16xf32>
    %180 = vector.multi_reduction <add>, %179, %cst_48 [1] : vector<16x16xf32> to vector<16xf32>
    %181 = vector.shape_cast %180 : vector<16xf32> to vector<16x1xf32>
    %182 = tpu.reciprocal %181 {approx = true} : vector<16x1xf32> -> vector<16x1xf32>
    %183 = vector.broadcast %182 : vector<16x1xf32> to vector<16x16xf32>
    %184 = arith.mulf %179, %183 : vector<16x16xf32>
    %cst_49 = arith.constant dense<0.000000e+00> : vector<16x8xf32>
    %185 = tpu.matmul %184, %171, %cst_49 {dimension_numbers = #tpu.dot_dimension_numbers<[1], [0], [0], [1], [0, 0, 1, 1], [], []>} : vector<16x16xf32>, vector<16x8xf32>, vector<16x8xf32> -> vector<16x8xf32>
    %186 = vector.extract_strided_slice %67 {offsets = [40, 0], sizes = [8, 48], strides = [1, 1]} : vector<48x48xf32> to vector<8x48xf32>
    %cst_50 = arith.constant dense<0.000000e+00> : vector<16x48xf32>
    %187 = tpu.matmul %185, %186, %cst_50 {dimension_numbers = #tpu.dot_dimension_numbers<[1], [0], [0], [1], [0, 0, 1, 1], [], []>} : vector<16x8xf32>, vector<8x48xf32>, vector<16x48xf32> -> vector<16x48xf32>
    %188 = arith.addf %168, %187 : vector<16x48xf32>
    %189 = arith.addf %0, %188 : vector<16x48xf32>
    %cst_51 = arith.constant dense<0.000000e+00> : vector<16xf32>
    %190 = vector.multi_reduction <add>, %189, %cst_51 [1] : vector<16x48xf32> to vector<16xf32>
    %191 = vector.shape_cast %190 : vector<16xf32> to vector<16x1xf32>
    %cst_52 = arith.constant 4.800000e+01 : f32
    %192 = vector.broadcast %cst_52 : f32 to vector<16x1xf32>
    %193 = arith.divf %191, %192 : vector<16x1xf32>
    %194 = vector.broadcast %193 : vector<16x1xf32> to vector<16x48xf32>
    %195 = arith.subf %189, %194 : vector<16x48xf32>
    %196 = arith.mulf %195, %195 : vector<16x48xf32>
    %cst_53 = arith.constant dense<0.000000e+00> : vector<16xf32>
    %197 = vector.multi_reduction <add>, %196, %cst_53 [1] : vector<16x48xf32> to vector<16xf32>
    %198 = vector.shape_cast %197 : vector<16xf32> to vector<16x1xf32>
    %cst_54 = arith.constant 0.0212765951 : f32
    %199 = vector.broadcast %cst_54 : f32 to vector<16x1xf32>
    %200 = arith.mulf %198, %199 : vector<16x1xf32>
    %201 = math.sqrt %200 : vector<16x1xf32>
    %cst_55 = arith.constant 9.99999996E-13 : f32
    %202 = vector.broadcast %cst_55 : f32 to vector<16x1xf32>
    %203 = arith.addf %201, %202 : vector<16x1xf32>
    %cst_56 = arith.constant 1.000000e+00 : f32
    %204 = vector.broadcast %cst_56 : f32 to vector<16x1xf32>
    %205 = arith.divf %204, %203 : vector<16x1xf32>
    %206 = vector.broadcast %205 : vector<16x1xf32> to vector<16x48xf32>
    %207 = arith.mulf %195, %206 : vector<16x48xf32>
    %208 = vector.broadcast %8 : vector<1x48xf32> to vector<16x48xf32>
    %209 = arith.mulf %208, %207 : vector<16x48xf32>
    %210 = vector.broadcast %9 : vector<1x48xf32> to vector<16x48xf32>
    %211 = arith.addf %209, %210 : vector<16x48xf32>
    %c0_57 = arith.constant 0 : index
    %c0_58 = arith.constant 0 : index
    %212 = vector.load %arg3[%c0_57, %c0_58] : memref<48x96xf32, #tpu.memory_space<vmem>>, vector<48x96xf32>
    %cst_59 = arith.constant dense<0.000000e+00> : vector<16x96xf32>
    %213 = tpu.matmul %211, %212, %cst_59 {dimension_numbers = #tpu.dot_dimension_numbers<[1], [0], [0], [1], [0, 0, 1, 1], [], []>} : vector<16x48xf32>, vector<48x96xf32>, vector<16x96xf32> -> vector<16x96xf32>
    %214 = vector.broadcast %3 : vector<1x96xf32> to vector<16x96xf32>
    %215 = arith.addf %213, %214 : vector<16x96xf32>
    %cst_60 = arith.constant 5.000000e-01 : f32
    %216 = vector.broadcast %cst_60 : f32 to vector<16x96xf32>
    %217 = arith.mulf %216, %215 : vector<16x96xf32>
    %cst_61 = arith.constant 4.471500e-02 : f32
    %218 = vector.broadcast %cst_61 : f32 to vector<16x96xf32>
    %219 = arith.mulf %218, %215 : vector<16x96xf32>
    %220 = arith.mulf %219, %215 : vector<16x96xf32>
    %221 = arith.mulf %220, %215 : vector<16x96xf32>
    %222 = arith.addf %215, %221 : vector<16x96xf32>
    %cst_62 = arith.constant 0.797884583 : f32
    %223 = vector.broadcast %cst_62 : f32 to vector<16x96xf32>
    %224 = arith.mulf %223, %222 : vector<16x96xf32>
    %225 = math.tanh %224 : vector<16x96xf32>
    %cst_63 = arith.constant 1.000000e+00 : f32
    %226 = vector.broadcast %cst_63 : f32 to vector<16x96xf32>
    %227 = arith.addf %226, %225 : vector<16x96xf32>
    %228 = arith.mulf %217, %227 : vector<16x96xf32>
    %c0_64 = arith.constant 0 : index
    %c0_65 = arith.constant 0 : index
    %229 = vector.load %arg4[%c0_64, %c0_65] : memref<96x48xf32, #tpu.memory_space<vmem>>, vector<96x48xf32>
    %cst_66 = arith.constant dense<0.000000e+00> : vector<16x48xf32>
    %230 = tpu.matmul %228, %229, %cst_66 {dimension_numbers = #tpu.dot_dimension_numbers<[1], [0], [0], [1], [0, 0, 1, 1], [], []>} : vector<16x96xf32>, vector<96x48xf32>, vector<16x48xf32> -> vector<16x48xf32>
    %231 = vector.broadcast %5 : vector<1x48xf32> to vector<16x48xf32>
    %232 = arith.addf %230, %231 : vector<16x48xf32>
    %233 = arith.addf %189, %232 : vector<16x48xf32>
    %c0_67 = arith.constant 0 : index
    %c0_68 = arith.constant 0 : index
    %234 = vector.load %arg6[%c0_67, %c0_68] : memref<16x48xf32, #tpu.memory_space<vmem>>, vector<16x48xf32>
    tpu.vector_store %arg6[%c0_67, %c0_68], %233 {strides = array<i32>} : memref<16x48xf32, #tpu.memory_space<vmem>>, vector<16x48xf32>,
    return
  }
}

</mosaic_0001>

<llo_original>
// kernel: transformer_block.1
$region0: #{transformer_block.1}
  #allocation0 [shape = 'u32[]', space=smem, size = 0x4, offset = 0x4, fixed_abs, tag = 'smem constant byte address 0x4 - core index']
  #allocation1 [shape = 'u32[144,128]{1,0:T(1,128)}', space=vmem, size = 0x12000, scoped, tag = 'internal scratch']
  %s0 = inlined_call_operand.vmem [shape: f32[16,48], index: 0, kind: input, shape index: {}]
  %s1 = inlined_call_operand.vmem [shape: f32[48,144], index: 1, kind: input, shape index: {}]
  %s2 = inlined_call_operand.vmem [shape: f32[48,48], index: 2, kind: input, shape index: {}]
  %s3 = inlined_call_operand.vmem [shape: f32[48,96], index: 3, kind: input, shape index: {}]
  %s4 = inlined_call_operand.vmem [shape: f32[96,48], index: 4, kind: input, shape index: {}]
  %s5 = inlined_call_operand.vmem [shape: f32[8,144], index: 5, kind: input, shape index: {}]
  %s6 = inlined_call_operand.hbm [shape: f32[16,48], index: 6, kind: output, shape index: {}]
  %s7 = sld [smem:[#allocation0]]
  $region34: #{transformer_block.1} parent=0
    _
  %s9 = ssub.s32 1, %s7
  %s10 = scalar_select 0, %s9, %s7
  $region1: #{transformer_block.1} parent=0
    #allocation2 [shape = 'u8[8192]{0}', space=vmem, size = 0x2000, scoped, tag = 'output window, operand 0, single buffered']
    #allocation3 [shape = 's32[1]{0}', space=sflag, size = 0x4, scoped, tag = 'scoped memory for transformer_block.1']
    %11 = vsyncpa [#allocation3], 0
    // Predicated region
    $region2: #{transformer_block.1} parent=1 // pred_check
      _
    $region3: #{transformer_block.1} parent=1 // pred_check_branch
      %13 = sbr.rel (0) target = $region5
    $region4: #{transformer_block.1} parent=1 // pred_region
      _
    $region5: #{transformer_block.1} parent=1 // pred_fallthru
      _
    // Predicated region
    $region6: #{transformer_block.1} parent=1 // pred_check
      _
    $region7: #{transformer_block.1} parent=1 // pred_check_branch
      %15 = sbr.rel (0) target = $region9
    $region8: #{transformer_block.1} parent=1 // pred_region
      _
    $region9: #{transformer_block.1} parent=1 // pred_fallthru
      _
    // Predicated region
    $region10: #{transformer_block.1} parent=1 // pred_check
      _
    $region11: #{transformer_block.1} parent=1 // pred_check_branch
      %17 = sbr.rel (0) target = $region13
    $region12: #{transformer_block.1} parent=1 // pred_region
      _
    $region13: #{transformer_block.1} parent=1 // pred_fallthru
      _
    // Predicated region
    $region14: #{transformer_block.1} parent=1 // pred_check
      _
    $region15: #{transformer_block.1} parent=1 // pred_check_branch
      %19 = sbr.rel (0) target = $region17
    $region16: #{transformer_block.1} parent=1 // pred_region
      _
    $region17: #{transformer_block.1} parent=1 // pred_fallthru
      _
    // Predicated region
    $region18: #{transformer_block.1} parent=1 // pred_check
      _
    $region19: #{transformer_block.1} parent=1 // pred_check_branch
      %21 = sbr.rel (0) target = $region21
    $region20: #{transformer_block.1} parent=1 // pred_region
      _
    $region21: #{transformer_block.1} parent=1 // pred_fallthru
      _
    // Predicated region
    $region22: #{transformer_block.1} parent=1 // pred_check
      _
    $region23: #{transformer_block.1} parent=1 // pred_check_branch
      %23 = sbr.rel (0) target = $region25
    $region24: #{transformer_block.1} parent=1 // pred_region
      _
    $region25: #{transformer_block.1} parent=1 // pred_fallthru
      _
    %v24 = vld [vmem:[%s0] sm:$0xff]
    %v25 = vld [vmem:[%s0 + $0x8] sm:$0xff]
    %v26 = vld [vmem:[%s5] sm:$0xff]
    %v27 = vld [vmem:[%s5 + $0x8] sm:$0xff]
    %vm28 = vcmask 392192
    %v29 = vsel %vm28, %v24, 0.0
    %30 = vadd.xlane.f32.xlu0 %v29
    %v31 = vpop.xlane.xlu0 %30
    %v32 = vsel %vm28, %v25, 0.0
    %33 = vadd.xlane.f32.xlu0 %v32
    %v34 = vpop.xlane.xlu0 %33
    %v35 = vrcp.pop 48.0
    %v36 = vmul.f32 %v31, %v35
    %v37 = vmul.f32 %v34, %v35
    %v38 = vsub.f32 %v24, %v36
    %v39 = vsub.f32 %v25, %v37
    %v40 = vmul.f32 %v38, %v38
    %v41 = vmul.f32 %v39, %v39
    %v42 = vsel %vm28, %v40, 0.0
    %43 = vadd.xlane.f32.xlu0 %v42
    %v44 = vpop.xlane.xlu0 %43
    %v45 = vsel %vm28, %v41, 0.0
    %46 = vadd.xlane.f32.xlu0 %v45
    %v47 = vpop.xlane.xlu0 %46
    %v48 = vmul.f32 %v44, 0.021276595
    %v49 = vmul.f32 %v47, 0.021276595
    %v50 = vrsqrt.pop %v48
    %v51 = vmul.f32 %v48, %v50
    %vm52 = vcmp.eq.f32.partialorder %v48, inf
    %v53 = vsel %vm52, %v48, %v51
    %vm54 = vcmp.eq.f32.partialorder %v48, 0.0
    %v55 = vand.u32 %v48, 2147483648
    %v56 = vsel %vm54, %v55, %v53
    %v57 = vrsqrt.pop %v49
    %v58 = vmul.f32 %v49, %v57
    %vm59 = vcmp.eq.f32.partialorder %v49, inf
    %v60 = vsel %vm59, %v49, %v58
    %vm61 = vcmp.eq.f32.partialorder %v49, 0.0
    %v62 = vand.u32 %v49, 2147483648
    %v63 = vsel %vm61, %v62, %v60
    %v64 = vadd.f32 %v56, 1e-12
    %v65 = vadd.f32 %v63, 1e-12
    %v66 = vrcp.pop %v64
    %v67 = vmul.f32 1.0, %v66
    %v68 = vrcp.pop %v65
    %v69 = vmul.f32 1.0, %v68
    %v70 = vmul.f32 %v38, %v67
    %v71 = vmul.f32 %v39, %v69
    %v72 = vlaneseq
    %v73 = vshrl.u32 %v72, 7
    %v74 = vsub.s32 4, %v73
    %v75 = vrot.slane %v26, %v74
    %v76 = vmul.f32 %v75, %v70
    %v77 = vmul.f32 %v75, %v71
    %v78 = vlaneseq
    %v79 = vshrl.u32 %v78, 7
    %v80 = vsub.s32 5, %v79
    %v81 = vrot.slane %v26, %v80
    %v82 = vadd.f32 %v76, %v81
    %v83 = vadd.f32 %v77, %v81
    %v84 = vld [vmem:[%s1] sm:$0xff]
    %v85 = vld [vmem:[%s1 + $0x8] sm:$0xff]
    %v86 = vld [vmem:[%s1 + $0x10] sm:$0xff]
    %v87 = vld [vmem:[%s1 + $0x18] sm:$0xff]
    %v88 = vld [vmem:[%s1 + $0x20] sm:$0xff]
    %v89 = vld [vmem:[%s1 + $0x28] sm:$0xff]
    %v90 = vld [vmem:[%s1 + $0x30] sm:$0xff]
    %v91 = vld [vmem:[%s1 + $0x38] sm:$0xff]
    %v92 = vld [vmem:[%s1 + $0x40] sm:$0xff]
    %v93 = vld [vmem:[%s1 + $0x48] sm:$0xff]
    %v94 = vld [vmem:[%s1 + $0x50] sm:$0xff]
    %v95 = vld [vmem:[%s1 + $0x58] sm:$0xff]
    %v96 = vlaneseq
    %v97 = vshrl.u32 %v96, 7
    %v98 = vsub.s32 0, %v97
    %v99 = vrot.slane %v26, %v98
    %v100 = vlaneseq
    %v101 = vshrl.u32 %v100, 7
    %v102 = vsub.s32 0, %v101
    %v103 = vrot.slane %v27, %v102
    %v105 = vsel %vm28, %v82, 0
    %v108 = vsel %vm28, %v83, 0
    %110 = vmatprep.subr.mxu0 %v85
    %111 = vmatpush1.msra.mxu0 %v84
    %112 = vmatprep.subr.mxu0 %v87
    %113 = vmatpush1.msra.mxu0 %v86
    %114 = vmatprep.subr.mxu0 %v89
    %115 = vmatpush1.msra.mxu0 %v88
    %116 = vmatprep.subr.mxu0 %v91
    %117 = vmatpush1.msra.mxu0 %v90
    %118 = vmatprep.subr.mxu0 %v93
    %119 = vmatpush1.msra.mxu0 %v92
    %120 = vmatprep.subr.mxu0 %v95
    %121 = vmatpush1.msra.mxu0 %v94
    %122 = vmatprep.subr.mxu0 0.0
    %123 = vmatpush1.msra.mxu0 0.0
    %124 = vmatprep.subr.mxu0 0.0
    %125 = vmatpush1.msra.mxu0 0.0
    %126 = vmatprep.subr.mxu0 0.0
    %127 = vmatpush1.msra.mxu0 0.0
    %128 = vmatprep.subr.mxu0 0.0
    %129 = vmatpush1.msra.mxu0 0.0
    %130 = vmatprep.subr.mxu0 0.0
    %131 = vmatpush1.msra.mxu0 0.0
    %132 = vmatprep.subr.mxu0 0.0
    %133 = vmatpush1.msra.mxu0 0.0
    %134 = vmatprep.subr.mxu0 0.0
    %135 = vmatpush1.msra.mxu0 0.0
    %136 = vmatprep.subr.mxu0 0.0
    %137 = vmatpush1.msra.mxu0 0.0
    %138 = vmatprep.subr.mxu0 0.0
    %139 = vmatpush1.msra.mxu0 0.0
    %140 = vmatprep.subr.mxu0 0.0
    %141 = vmatpush1.msra.mxu0 0.0
    %142 = vmatprep.subr.mxu0 0.0
    %143 = vmatpush1.msra.mxu0 0.0
    %144 = vmatprep.subr.mxu0 0.0
    %145 = vmatpush1.msra.mxu0 0.0
    %146 = vmatprep.subr.mxu0 0.0
    %147 = vmatpush1.msra.mxu0 0.0
    %148 = vmatprep.subr.mxu0 0.0
    %149 = vmatpush1.msra.mxu0 0.0
    %150 = vmatprep.subr.mxu0 0.0
    %151 = vmatpush1.msra.mxu0 0.0
    %152 = vmatprep.subr.mxu0 0.0
    %153 = vmatpush1.msra.mxu0 0.0
    %154 = vmatprep.subr.mxu0 0.0
    %155 = vmatpush1.msra.mxu0 0.0
    %156 = vmatprep.subr.mxu0 0.0
    %157 = vmatpush1.msra.mxu0 0.0
    %158 = vmatprep.subr.mxu0 0.0
    %159 = vmatpush1.msra.mxu0 0.0
    %160 = vmatprep.subr.mxu0 0.0
    %161 = vmatpush1.msra.mxu0 0.0
    %162 = vmatprep.subr.mxu0 0.0
    %163 = vmatpush1.msra.mxu0 0.0
    %164 = vmatprep.subr.mxu0 0.0
    %165 = vmatpush1.msra.mxu0 0.0
    %166 = vmatprep.subr.mxu0 0.0
    %167 = vmatpush1.msra.mxu0 0.0
    %168 = vmatprep.subr.mxu0 0.0
    %169 = vmatpush1.msra.mxu0 0.0
    %170 = vmatprep.subr.mxu0 0.0
    %171 = vmatpush1.msra.mxu0 0.0
    %172 = vmatprep.subr.mxu0 0.0
    %173 = vmatpush1.msra.mxu0 0.0
    %174 = vmatprep.mubr.f32.mxu0 0.0
    %175 = vmatmul.mubr.f32.gmra.mrb[0].mxu0 %v105
    %v176 = vpop.f32.mrb[0].mxu0
    %v177 = vadd.f32 %v99, %v176
    %v178 = vpop.f32.mrb[0].mxu0
    %v179 = vadd.f32 %v103, %v178
    %180 = vmatprep.mubr.f32.mxu0 0.0
    %181 = vmatmul.mubr.f32.gmra.mrb[0].mxu0 %v108
    %v182 = vpop.f32.mrb[0].mxu0
    %v183 = vadd.f32 %v99, %v182
    %v184 = vpop.f32.mrb[0].mxu0
    %v185 = vadd.f32 %v103, %v184
    %186 = vdwg.mxu0
    %v187 = vmul.f32 %v177, 0.35355338
    %v188 = vmul.f32 %v183, 0.35355338
    %v189 = vlaneseq
    %v190 = vshrl.u32 %v189, 7
    %v191 = vadd.s32 %v190, 8
    %v192 = vlaneseq
    %v193 = vand.u32 %v192, 127
    %vm194 = vcmp.ge.s32.totalorder %v190, 0
    %vm195 = vcmp.ge.s32.totalorder %v191, 0
    %vm196 = vcmp.lt.s32.totalorder %v190, 8
    %vm197 = vcmp.lt.s32.totalorder %v191, 8
    %vm198 = vmand %vm194, %vm196
    %vm199 = vmand %vm195, %vm197
    %vm200 = vcmp.ge.s32.totalorder %v193, 0
    %vm201 = vcmp.lt.s32.totalorder %v193, 8
    %vm202 = vmand %vm200, %vm201
    %vm203 = vmand %vm198, %vm202
    %vm204 = vmand %vm199, %vm202
    %vm205 = vcmp.ge.s32.totalorder %v190, 8
    %vm206 = vcmp.ge.s32.totalorder %v191, 8
    %vm207 = vcmp.lt.s32.totalorder %v190, 16
    %vm208 = vcmp.lt.s32.totalorder %v191, 16
    %vm209 = vmand %vm205, %vm207
    %vm210 = vmand %vm206, %vm208
    %vm211 = vcmp.ge.s32.totalorder %v193, 8
    %vm212 = vcmp.lt.s32.totalorder %v193, 16
    %vm213 = vmand %vm211, %vm212
    %vm214 = vmand %vm209, %vm213
    %vm215 = vmand %vm210, %vm213
    %vm216 = vmor %vm203, %vm214
    %vm217 = vmor %vm204, %vm215
    %v218 = vsel %vm216, 0.0, -1e+30
    %v219 = vsel %vm217, 0.0, -1e+30
    %v220 = vld [vmem:[%s2] sm:$0xff]
    %v221 = vld [vmem:[%s2 + $0x8] sm:$0xff]
    %v222 = vld [vmem:[%s2 + $0x10] sm:$0xff]
    %v223 = vld [vmem:[%s2 + $0x18] sm:$0xff]
    %v224 = vld [vmem:[%s2 + $0x20] sm:$0xff]
    %v225 = vld [vmem:[%s2 + $0x28] sm:$0xff]
    %228 = vrot.lane.b32.xlu0 %v177, 80
    %v229 = vpop.permute.xlu0 %228
    %230 = vrot.lane.b32.xlu0 %v183, 80
    %v231 = vpop.permute.xlu0 %230
    %vm232 = vcmask 64512
    %v234 = vsel %vm232, %v187, 0
    %v237 = vsel %vm232, %v188, 0
    %v239 = vsel %vm232, %v229, 0
    %v241 = vsel %vm232, %v231, 0
    %243 = vmatprep.subr.mxu0 0.0
    %244 = vmatpush1.xpose.msra.mxu0 %v239
    %245 = vmatprep.subr.mxu0 0.0
    %246 = vmatpush1.xpose.msra.mxu0 %v241
    %247 = vmatprep.subr.mxu0 0.0
    %248 = vmatpush1.xpose.msra.mxu0 0.0
    %249 = vmatprep.subr.mxu0 0.0
    %250 = vmatpush1.xpose.msra.mxu0 0.0
    %251 = vmatprep.subr.mxu0 0.0
    %252 = vmatpush1.xpose.msra.mxu0 0.0
    %253 = vmatprep.subr.mxu0 0.0
    %254 = vmatpush1.xpose.msra.mxu0 0.0
    %255 = vmatprep.subr.mxu0 0.0
    %256 = vmatpush1.xpose.msra.mxu0 0.0
    %257 = vmatprep.subr.mxu0 0.0
    %258 = vmatpush1.xpose.msra.mxu0 0.0
    %259 = vmatprep.subr.mxu0 0.0
    %260 = vmatpush1.xpose.msra.mxu0 0.0
    %261 = vmatprep.subr.mxu0 0.0
    %262 = vmatpush1.xpose.msra.mxu0 0.0
    %263 = vmatprep.subr.mxu0 0.0
    %264 = vmatpush1.xpose.msra.mxu0 0.0
    %265 = vmatprep.subr.mxu0 0.0
    %266 = vmatpush1.xpose.msra.mxu0 0.0
    %267 = vmatprep.subr.mxu0 0.0
    %268 = vmatpush1.xpose.msra.mxu0 0.0
    %269 = vmatprep.subr.mxu0 0.0
    %270 = vmatpush1.xpose.msra.mxu0 0.0
    %271 = vmatprep.subr.mxu0 0.0
    %272 = vmatpush1.xpose.msra.mxu0 0.0
    %273 = vmatprep.subr.mxu0 0.0
    %274 = vmatpush1.xpose.msra.mxu0 0.0
    %275 = vmatprep.subr.mxu0 0.0
    %276 = vmatpush1.xpose.msra.mxu0 0.0
    %277 = vmatprep.subr.mxu0 0.0
    %278 = vmatpush1.xpose.msra.mxu0 0.0
    %279 = vmatprep.subr.mxu0 0.0
    %280 = vmatpush1.xpose.msra.mxu0 0.0
    %281 = vmatprep.subr.mxu0 0.0
    %282 = vmatpush1.xpose.msra.mxu0 0.0
    %283 = vmatprep.subr.mxu0 0.0
    %284 = vmatpush1.xpose.msra.mxu0 0.0
    %285 = vmatprep.subr.mxu0 0.0
    %286 = vmatpush1.xpose.msra.mxu0 0.0
    %287 = vmatprep.subr.mxu0 0.0
    %288 = vmatpush1.xpose.msra.mxu0 0.0
    %289 = vmatprep.subr.mxu0 0.0
    %290 = vmatpush1.xpose.msra.mxu0 0.0
    %291 = vmatprep.subr.mxu0 0.0
    %292 = vmatpush1.xpose.msra.mxu0 0.0
    %293 = vmatprep.subr.mxu0 0.0
    %294 = vmatpush1.xpose.msra.mxu0 0.0
    %295 = vmatprep.subr.mxu0 0.0
    %296 = vmatpush1.xpose.msra.mxu0 0.0
    %297 = vmatprep.subr.mxu0 0.0
    %298 = vmatpush1.xpose.msra.mxu0 0.0
    %299 = vmatprep.subr.mxu0 0.0
    %300 = vmatpush1.xpose.msra.mxu0 0.0
    %301 = vmatprep.subr.mxu0 0.0
    %302 = vmatpush1.xpose.msra.mxu0 0.0
    %303 = vmatprep.subr.mxu0 0.0
    %304 = vmatpush1.xpose.msra.mxu0 0.0
    %305 = vmatprep.subr.mxu0 0.0
    %306 = vmatpush1.xpose.msra.mxu0 0.0
    %307 = vmatprep.mubr.f32.mxu0 0.0
    %308 = vmatmul.mubr.f32.gmra.mrb[0].mxu0 %v234
    %v309 = vpop.f32.mrb[0].mxu0
    %v310 = vadd.f32 %v218, %v309
    %v311 = vpop.f32.mrb[0].mxu0
    %312 = vmatprep.mubr.f32.mxu0 0.0
    %313 = vmatmul.mubr.f32.gmra.mrb[0].mxu0 %v237
    %v314 = vpop.f32.mrb[0].mxu0
    %v315 = vadd.f32 %v219, %v314
    %v316 = vpop.f32.mrb[0].mxu0
    %317 = vdwg.mxu0
    %vm318 = vcmask 130048
    %v319 = vsel %vm318, %v310, -inf
    %320 = vmax.xlane.f32.xlu0 %v319
    %v321 = vpop.xlane.xlu0 %320
    %v322 = vsel %vm318, %v315, -inf
    %323 = vmax.xlane.f32.xlu0 %v322
    %v324 = vpop.xlane.xlu0 %323
    %v325 = vsub.f32 %v310, %v321
    %v326 = vsub.f32 %v315, %v324
    %v327 = vmul.f32 %v325, 1.442695
    %v328 = vpow.pop %v327
    %v329 = vmul.f32 %v326, 1.442695
    %v330 = vpow.pop %v329
    %v331 = vsel %vm318, %v328, 0.0
    %332 = vadd.xlane.f32.xlu0 %v331
    %v333 = vpop.xlane.xlu0 %332
    %v334 = vsel %vm318, %v330, 0.0
    %335 = vadd.xlane.f32.xlu0 %v334
    %v336 = vpop.xlane.xlu0 %335
    %v337 = vrcp.pop %v333
    %v338 = vrcp.pop %v336
    %v339 = vmul.f32 %v328, %v337
    %v340 = vmul.f32 %v330, %v338
    %341 = vrot.lane.b32.xlu0 %v177, 32
    %v342 = vpop.permute.xlu0 %341
    %343 = vrot.lane.b32.xlu0 %v183, 32
    %v344 = vpop.permute.xlu0 %343
    %v348 = vsel %vm318, %v339, 0
    %v351 = vsel %vm318, %v340, 0
    %353 = vmatprep.subr.mxu0 0.0
    %354 = vmatpush1.msra.mxu0 %v342
    %355 = vmatprep.subr.mxu0 0.0
    %356 = vmatpush1.msra.mxu0 %v344
    %357 = vmatprep.subr.mxu0 0.0
    %358 = vmatpush1.msra.mxu0 0.0
    %359 = vmatprep.subr.mxu0 0.0
    %360 = vmatpush1.msra.mxu0 0.0
    %361 = vmatprep.subr.mxu0 0.0
    %362 = vmatpush1.msra.mxu0 0.0
    %363 = vmatprep.subr.mxu0 0.0
    %364 = vmatpush1.msra.mxu0 0.0
    %365 = vmatprep.subr.mxu0 0.0
    %366 = vmatpush1.msra.mxu0 0.0
    %367 = vmatprep.subr.mxu0 0.0
    %368 = vmatpush1.msra.mxu0 0.0
    %369 = vmatprep.subr.mxu0 0.0
    %370 = vmatpush1.msra.mxu0 0.0
    %371 = vmatprep.subr.mxu0 0.0
    %372 = vmatpush1.msra.mxu0 0.0
    %373 = vmatprep.subr.mxu0 0.0
    %374 = vmatpush1.msra.mxu0 0.0
    %375 = vmatprep.subr.mxu0 0.0
    %376 = vmatpush1.msra.mxu0 0.0
    %377 = vmatprep.subr.mxu0 0.0
    %378 = vmatpush1.msra.mxu0 0.0
    %379 = vmatprep.subr.mxu0 0.0
    %380 = vmatpush1.msra.mxu0 0.0
    %381 = vmatprep.subr.mxu0 0.0
    %382 = vmatpush1.msra.mxu0 0.0
    %383 = vmatprep.subr.mxu0 0.0
    %384 = vmatpush1.msra.mxu0 0.0
    %385 = vmatprep.subr.mxu0 0.0
    %386 = vmatpush1.msra.mxu0 0.0
    %387 = vmatprep.subr.mxu0 0.0
    %388 = vmatpush1.msra.mxu0 0.0
    %389 = vmatprep.subr.mxu0 0.0
    %390 = vmatpush1.msra.mxu0 0.0
    %391 = vmatprep.subr.mxu0 0.0
    %392 = vmatpush1.msra.mxu0 0.0
    %393 = vmatprep.subr.mxu0 0.0
    %394 = vmatpush1.msra.mxu0 0.0
    %395 = vmatprep.subr.mxu0 0.0
    %396 = vmatpush1.msra.mxu0 0.0
    %397 = vmatprep.subr.mxu0 0.0
    %398 = vmatpush1.msra.mxu0 0.0
    %399 = vmatprep.subr.mxu0 0.0
    %400 = vmatpush1.msra.mxu0 0.0
    %401 = vmatprep.subr.mxu0 0.0
    %402 = vmatpush1.msra.mxu0 0.0
    %403 = vmatprep.subr.mxu0 0.0
    %404 = vmatpush1.msra.mxu0 0.0
    %405 = vmatprep.subr.mxu0 0.0
    %406 = vmatpush1.msra.mxu0 0.0
    %407 = vmatprep.subr.mxu0 0.0
    %408 = vmatpush1.msra.mxu0 0.0
    %409 = vmatprep.subr.mxu0 0.0
    %410 = vmatpush1.msra.mxu0 0.0
    %411 = vmatprep.subr.mxu0 0.0
    %412 = vmatpush1.msra.mxu0 0.0
    %413 = vmatprep.subr.mxu0 0.0
    %414 = vmatpush1.msra.mxu0 0.0
    %415 = vmatprep.subr.mxu0 0.0
    %416 = vmatpush1.msra.mxu0 0.0
    %417 = vmatprep.mubr.f32.mxu0 0.0
    %418 = vmatmul.mubr.f32.gmra.mrb[0].mxu0 %v348
    %v419 = vpop.f32.mrb[0].mxu0
    %v420 = vadd.f32 0.0, %v419
    %v421 = vpop.f32.mrb[0].mxu0
    %422 = vmatprep.mubr.f32.mxu0 0.0
    %423 = vmatmul.mubr.f32.gmra.mrb[0].mxu0 %v351
    %v424 = vpop.f32.mrb[0].mxu0
    %v425 = vadd.f32 0.0, %v424
    %v426 = vpop.f32.mrb[0].mxu0
    %427 = vdwg.mxu0
    %v429 = vsel %vm232, %v420, 0
    %v432 = vsel %vm232, %v425, 0
    %434 = vmatprep.subr.mxu0 0.0
    %435 = vmatpush1.msra.mxu0 %v220
    %436 = vmatprep.subr.mxu0 0.0
    %437 = vmatpush1.msra.mxu0 0.0
    %438 = vmatprep.subr.mxu0 0.0
    %439 = vmatpush1.msra.mxu0 0.0
    %440 = vmatprep.subr.mxu0 0.0
    %441 = vmatpush1.msra.mxu0 0.0
    %442 = vmatprep.subr.mxu0 0.0
    %443 = vmatpush1.msra.mxu0 0.0
    %444 = vmatprep.subr.mxu0 0.0
    %445 = vmatpush1.msra.mxu0 0.0
    %446 = vmatprep.subr.mxu0 0.0
    %447 = vmatpush1.msra.mxu0 0.0
    %448 = vmatprep.subr.mxu0 0.0
    %449 = vmatpush1.msra.mxu0 0.0
    %450 = vmatprep.subr.mxu0 0.0
    %451 = vmatpush1.msra.mxu0 0.0
    %452 = vmatprep.subr.mxu0 0.0
    %453 = vmatpush1.msra.mxu0 0.0
    %454 = vmatprep.subr.mxu0 0.0
    %455 = vmatpush1.msra.mxu0 0.0
    %456 = vmatprep.subr.mxu0 0.0
    %457 = vmatpush1.msra.mxu0 0.0
    %458 = vmatprep.subr.mxu0 0.0
    %459 = vmatpush1.msra.mxu0 0.0
    %460 = vmatprep.subr.mxu0 0.0
    %461 = vmatpush1.msra.mxu0 0.0
    %462 = vmatprep.subr.mxu0 0.0
    %463 = vmatpush1.msra.mxu0 0.0
    %464 = vmatprep.subr.mxu0 0.0
    %465 = vmatpush1.msra.mxu0 0.0
    %466 = vmatprep.subr.mxu0 0.0
    %467 = vmatpush1.msra.mxu0 0.0
    %468 = vmatprep.subr.mxu0 0.0
    %469 = vmatpush1.msra.mxu0 0.0
    %470 = vmatprep.subr.mxu0 0.0
    %471 = vmatpush1.msra.mxu0 0.0
    %472 = vmatprep.subr.mxu0 0.0
    %473 = vmatpush1.msra.mxu0 0.0
    %474 = vmatprep.subr.mxu0 0.0
    %475 = vmatpush1.msra.mxu0 0.0
    %476 = vmatprep.subr.mxu0 0.0
    %477 = vmatpush1.msra.mxu0 0.0
    %478 = vmatprep.subr.mxu0 0.0
    %479 = vmatpush1.msra.mxu0 0.0
    %480 = vmatprep.subr.mxu0 0.0
    %481 = vmatpush1.msra.mxu0 0.0
    %482 = vmatprep.subr.mxu0 0.0
    %483 = vmatpush1.msra.mxu0 0.0
    %484 = vmatprep.subr.mxu0 0.0
    %485 = vmatpush1.msra.mxu0 0.0
    %486 = vmatprep.subr.mxu0 0.0
    %487 = vmatpush1.msra.mxu0 0.0
    %488 = vmatprep.subr.mxu0 0.0
    %489 = vmatpush1.msra.mxu0 0.0
    %490 = vmatprep.subr.mxu0 0.0
    %491 = vmatpush1.msra.mxu0 0.0
    %492 = vmatprep.subr.mxu0 0.0
    %493 = vmatpush1.msra.mxu0 0.0
    %494 = vmatprep.subr.mxu0 0.0
    %495 = vmatpush1.msra.mxu0 0.0
    %496 = vmatprep.subr.mxu0 0.0
    %497 = vmatpush1.msra.mxu0 0.0
    %498 = vmatprep.mubr.f32.mxu0 0.0
    %499 = vmatmul.mubr.f32.gmra.mrb[0].mxu0 %v429
    %v500 = vpop.f32.mrb[0].mxu0
    %v501 = vadd.f32 0.0, %v500
    %v502 = vpop.f32.mrb[0].mxu0
    %503 = vmatprep.mubr.f32.mxu0 0.0
    %504 = vmatmul.mubr.f32.gmra.mrb[0].mxu0 %v432
    %v505 = vpop.f32.mrb[0].mxu0
    %v506 = vadd.f32 0.0, %v505
    %v507 = vpop.f32.mrb[0].mxu0
    %508 = vdwg.mxu0
    %v509 = vlaneseq
    %v510 = vshrl.u32 %v509, 7
    %v511 = vsub.s32 2, %v510
    %v512 = vrot.slane %v26, %v511
    %v513 = vadd.f32 %v512, %v501
    %v514 = vadd.f32 %v512, %v506
    %515 = vrot.lane.b32.xlu0 %v187, 120
    %v516 = vpop.permute.xlu0 %515
    %517 = vrot.lane.b32.xlu0 %v188, 120
    %v518 = vpop.permute.xlu0 %517
    %519 = vrot.lane.b32.xlu0 %v177, 72
    %v520 = vpop.permute.xlu0 %519
    %521 = vrot.lane.b32.xlu0 %v183, 72
    %v522 = vpop.permute.xlu0 %521
    %v523 = vsel %vm232, %v516, 0
    %v525 = vsel %vm232, %v518, 0
    %v527 = vsel %vm232, %v520, 0
    %v529 = vsel %vm232, %v522, 0
    %531 = vmatprep.subr.mxu0 0.0
    %532 = vmatpush1.xpose.msra.mxu0 %v527
    %533 = vmatprep.subr.mxu0 0.0
    %534 = vmatpush1.xpose.msra.mxu0 %v529
    %535 = vmatprep.subr.mxu0 0.0
    %536 = vmatpush1.xpose.msra.mxu0 0.0
    %537 = vmatprep.subr.mxu0 0.0
    %538 = vmatpush1.xpose.msra.mxu0 0.0
    %539 = vmatprep.subr.mxu0 0.0
    %540 = vmatpush1.xpose.msra.mxu0 0.0
    %541 = vmatprep.subr.mxu0 0.0
    %542 = vmatpush1.xpose.msra.mxu0 0.0
    %543 = vmatprep.subr.mxu0 0.0
    %544 = vmatpush1.xpose.msra.mxu0 0.0
    %545 = vmatprep.subr.mxu0 0.0
    %546 = vmatpush1.xpose.msra.mxu0 0.0
    %547 = vmatprep.subr.mxu0 0.0
    %548 = vmatpush1.xpose.msra.mxu0 0.0
    %549 = vmatprep.subr.mxu0 0.0
    %550 = vmatpush1.xpose.msra.mxu0 0.0
    %551 = vmatprep.subr.mxu0 0.0
    %552 = vmatpush1.xpose.msra.mxu0 0.0
    %553 = vmatprep.subr.mxu0 0.0
    %554 = vmatpush1.xpose.msra.mxu0 0.0
    %555 = vmatprep.subr.mxu0 0.0
    %556 = vmatpush1.xpose.msra.mxu0 0.0
    %557 = vmatprep.subr.mxu0 0.0
    %558 = vmatpush1.xpose.msra.mxu0 0.0
    %559 = vmatprep.subr.mxu0 0.0
    %560 = vmatpush1.xpose.msra.mxu0 0.0
    %561 = vmatprep.subr.mxu0 0.0
    %562 = vmatpush1.xpose.msra.mxu0 0.0
    %563 = vmatprep.subr.mxu0 0.0
    %564 = vmatpush1.xpose.msra.mxu0 0.0
    %565 = vmatprep.subr.mxu0 0.0
    %566 = vmatpush1.xpose.msra.mxu0 0.0
    %567 = vmatprep.subr.mxu0 0.0
    %568 = vmatpush1.xpose.msra.mxu0 0.0
    %569 = vmatprep.subr.mxu0 0.0
    %570 = vmatpush1.xpose.msra.mxu0 0.0
    %571 = vmatprep.subr.mxu0 0.0
    %572 = vmatpush1.xpose.msra.mxu0 0.0
    %573 = vmatprep.subr.mxu0 0.0
    %574 = vmatpush1.xpose.msra.mxu0 0.0
    %575 = vmatprep.subr.mxu0 0.0
    %576 = vmatpush1.xpose.msra.mxu0 0.0
    %577 = vmatprep.subr.mxu0 0.0
    %578 = vmatpush1.xpose.msra.mxu0 0.0
    %579 = vmatprep.subr.mxu0 0.0
    %580 = vmatpush1.xpose.msra.mxu0 0.0
    %581 = vmatprep.subr.mxu0 0.0
    %582 = vmatpush1.xpose.msra.mxu0 0.0
    %583 = vmatprep.subr.mxu0 0.0
    %584 = vmatpush1.xpose.msra.mxu0 0.0
    %585 = vmatprep.subr.mxu0 0.0
    %586 = vmatpush1.xpose.msra.mxu0 0.0
    %587 = vmatprep.subr.mxu0 0.0
    %588 = vmatpush1.xpose.msra.mxu0 0.0
    %589 = vmatprep.subr.mxu0 0.0
    %590 = vmatpush1.xpose.msra.mxu0 0.0
    %591 = vmatprep.subr.mxu0 0.0
    %592 = vmatpush1.xpose.msra.mxu0 0.0
    %593 = vmatprep.subr.mxu0 0.0
    %594 = vmatpush1.xpose.msra.mxu0 0.0
    %595 = vmatprep.mubr.f32.mxu0 0.0
    %596 = vmatmul.mubr.f32.gmra.mrb[0].mxu0 %v523
    %v597 = vpop.f32.mrb[0].mxu0
    %v598 = vadd.f32 %v218, %v597
    %v599 = vpop.f32.mrb[0].mxu0
    %600 = vmatprep.mubr.f32.mxu0 0.0
    %601 = vmatmul.mubr.f32.gmra.mrb[0].mxu0 %v525
    %v602 = vpop.f32.mrb[0].mxu0
    %v603 = vadd.f32 %v219, %v602
    %v604 = vpop.f32.mrb[0].mxu0
    %605 = vdwg.mxu0
    %v606 = vsel %vm318, %v598, -inf
    %607 = vmax.xlane.f32.xlu0 %v606
    %v608 = vpop.xlane.xlu0 %607
    %v609 = vsel %vm318, %v603, -inf
    %610 = vmax.xlane.f32.xlu0 %v609
    %v611 = vpop.xlane.xlu0 %610
    %v612 = vsub.f32 %v598, %v608
    %v613 = vsub.f32 %v603, %v611
    %v614 = vmul.f32 %v612, 1.442695
    %v615 = vpow.pop %v614
    %v616 = vmul.f32 %v613, 1.442695
    %v617 = vpow.pop %v616
    %v618 = vsel %vm318, %v615, 0.0
    %619 = vadd.xlane.f32.xlu0 %v618
    %v620 = vpop.xlane.xlu0 %619
    %v621 = vsel %vm318, %v617, 0.0
    %622 = vadd.xlane.f32.xlu0 %v621
    %v623 = vpop.xlane.xlu0 %622
    %v624 = vrcp.pop %v620
    %v625 = vrcp.pop %v623
    %v626 = vmul.f32 %v615, %v624
    %v627 = vmul.f32 %v617, %v625
    %628 = vrot.lane.b32.xlu0 %v177, 24
    %v629 = vpop.permute.xlu0 %628
    %630 = vrot.lane.b32.xlu0 %v183, 24
    %v631 = vpop.permute.xlu0 %630
    %v635 = vsel %vm318, %v626, 0
    %v638 = vsel %vm318, %v627, 0
    %640 = vmatprep.subr.mxu0 0.0
    %641 = vmatpush1.msra.mxu0 %v629
    %642 = vmatprep.subr.mxu0 0.0
    %643 = vmatpush1.msra.mxu0 %v631
    %644 = vmatprep.subr.mxu0 0.0
    %645 = vmatpush1.msra.mxu0 0.0
    %646 = vmatprep.subr.mxu0 0.0
    %647 = vmatpush1.msra.mxu0 0.0
    %648 = vmatprep.subr.mxu0 0.0
    %649 = vmatpush1.msra.mxu0 0.0
    %650 = vmatprep.subr.mxu0 0.0
    %651 = vmatpush1.msra.mxu0 0.0
    %652 = vmatprep.subr.mxu0 0.0
    %653 = vmatpush1.msra.mxu0 0.0
    %654 = vmatprep.subr.mxu0 0.0
    %655 = vmatpush1.msra.mxu0 0.0
    %656 = vmatprep.subr.mxu0 0.0
    %657 = vmatpush1.msra.mxu0 0.0
    %658 = vmatprep.subr.mxu0 0.0
    %659 = vmatpush1.msra.mxu0 0.0
    %660 = vmatprep.subr.mxu0 0.0
    %661 = vmatpush1.msra.mxu0 0.0
    %662 = vmatprep.subr.mxu0 0.0
    %663 = vmatpush1.msra.mxu0 0.0
    %664 = vmatprep.subr.mxu0 0.0
    %665 = vmatpush1.msra.mxu0 0.0
    %666 = vmatprep.subr.mxu0 0.0
    %667 = vmatpush1.msra.mxu0 0.0
    %668 = vmatprep.subr.mxu0 0.0
    %669 = vmatpush1.msra.mxu0 0.0
    %670 = vmatprep.subr.mxu0 0.0
    %671 = vmatpush1.msra.mxu0 0.0
    %672 = vmatprep.subr.mxu0 0.0
    %673 = vmatpush1.msra.mxu0 0.0
    %674 = vmatprep.subr.mxu0 0.0
    %675 = vmatpush1.msra.mxu0 0.0
    %676 = vmatprep.subr.mxu0 0.0
    %677 = vmatpush1.msra.mxu0 0.0
    %678 = vmatprep.subr.mxu0 0.0
    %679 = vmatpush1.msra.mxu0 0.0
    %680 = vmatprep.subr.mxu0 0.0
    %681 = vmatpush1.msra.mxu0 0.0
    %682 = vmatprep.subr.mxu0 0.0
    %683 = vmatpush1.msra.mxu0 0.0
    %684 = vmatprep.subr.mxu0 0.0
    %685 = vmatpush1.msra.mxu0 0.0
    %686 = vmatprep.subr.mxu0 0.0
    %687 = vmatpush1.msra.mxu0 0.0
    %688 = vmatprep.subr.mxu0 0.0
    %689 = vmatpush1.msra.mxu0 0.0
    %690 = vmatprep.subr.mxu0 0.0
    %691 = vmatpush1.msra.mxu0 0.0
    %692 = vmatprep.subr.mxu0 0.0
    %693 = vmatpush1.msra.mxu0 0.0
    %694 = vmatprep.subr.mxu0 0.0
    %695 = vmatpush1.msra.mxu0 0.0
    %696 = vmatprep.subr.mxu0 0.0
    %697 = vmatpush1.msra.mxu0 0.0
    %698 = vmatprep.subr.mxu0 0.0
    %699 = vmatpush1.msra.mxu0 0.0
    %700 = vmatprep.subr.mxu0 0.0
    %701 = vmatpush1.msra.mxu0 0.0
    %702 = vmatprep.subr.mxu0 0.0
    %703 = vmatpush1.msra.mxu0 0.0
    %704 = vmatprep.mubr.f32.mxu0 0.0
    %705 = vmatmul.mubr.f32.gmra.mrb[0].mxu0 %v635
    %v706 = vpop.f32.mrb[0].mxu0
    %v707 = vadd.f32 0.0, %v706
    %v708 = vpop.f32.mrb[0].mxu0
    %709 = vmatprep.mubr.f32.mxu0 0.0
    %710 = vmatmul.mubr.f32.gmra.mrb[0].mxu0 %v638
    %v711 = vpop.f32.mrb[0].mxu0
    %v712 = vadd.f32 0.0, %v711
    %v713 = vpop.f32.mrb[0].mxu0
    %714 = vdwg.mxu0
    %v716 = vsel %vm232, %v707, 0
    %v719 = vsel %vm232, %v712, 0
    %721 = vmatprep.subr.mxu0 0.0
    %722 = vmatpush1.msra.mxu0 %v221
    %723 = vmatprep.subr.mxu0 0.0
    %724 = vmatpush1.msra.mxu0 0.0
    %725 = vmatprep.subr.mxu0 0.0
    %726 = vmatpush1.msra.mxu0 0.0
    %727 = vmatprep.subr.mxu0 0.0
    %728 = vmatpush1.msra.mxu0 0.0
    %729 = vmatprep.subr.mxu0 0.0
    %730 = vmatpush1.msra.mxu0 0.0
    %731 = vmatprep.subr.mxu0 0.0
    %732 = vmatpush1.msra.mxu0 0.0
    %733 = vmatprep.subr.mxu0 0.0
    %734 = vmatpush1.msra.mxu0 0.0
    %735 = vmatprep.subr.mxu0 0.0
    %736 = vmatpush1.msra.mxu0 0.0
    %737 = vmatprep.subr.mxu0 0.0
    %738 = vmatpush1.msra.mxu0 0.0
    %739 = vmatprep.subr.mxu0 0.0
    %740 = vmatpush1.msra.mxu0 0.0
    %741 = vmatprep.subr.mxu0 0.0
    %742 = vmatpush1.msra.mxu0 0.0
    %743 = vmatprep.subr.mxu0 0.0
    %744 = vmatpush1.msra.mxu0 0.0
    %745 = vmatprep.subr.mxu0 0.0
    %746 = vmatpush1.msra.mxu0 0.0
    %747 = vmatprep.subr.mxu0 0.0
    %748 = vmatpush1.msra.mxu0 0.0
    %749 = vmatprep.subr.mxu0 0.0
    %750 = vmatpush1.msra.mxu0 0.0
    %751 = vmatprep.subr.mxu0 0.0
    %752 = vmatpush1.msra.mxu0 0.0
    %753 = vmatprep.subr.mxu0 0.0
    %754 = vmatpush1.msra.mxu0 0.0
    %755 = vmatprep.subr.mxu0 0.0
    %756 = vmatpush1.msra.mxu0 0.0
    %757 = vmatprep.subr.mxu0 0.0
    %758 = vmatpush1.msra.mxu0 0.0
    %759 = vmatprep.subr.mxu0 0.0
    %760 = vmatpush1.msra.mxu0 0.0
    %761 = vmatprep.subr.mxu0 0.0
    %762 = vmatpush1.msra.mxu0 0.0
    %763 = vmatprep.subr.mxu0 0.0
    %764 = vmatpush1.msra.mxu0 0.0
    %765 = vmatprep.subr.mxu0 0.0
    %766 = vmatpush1.msra.mxu0 0.0
    %767 = vmatprep.subr.mxu0 0.0
    %768 = vmatpush1.msra.mxu0 0.0
    %769 = vmatprep.subr.mxu0 0.0
    %770 = vmatpush1.msra.mxu0 0.0
    %771 = vmatprep.subr.mxu0 0.0
    %772 = vmatpush1.msra.mxu0 0.0
    %773 = vmatprep.subr.mxu0 0.0
    %774 = vmatpush1.msra.mxu0 0.0
    %775 = vmatprep.subr.mxu0 0.0
    %776 = vmatpush1.msra.mxu0 0.0
    %777 = vmatprep.subr.mxu0 0.0
    %778 = vmatpush1.msra.mxu0 0.0
    %779 = vmatprep.subr.mxu0 0.0
    %780 = vmatpush1.msra.mxu0 0.0
    %781 = vmatprep.subr.mxu0 0.0
    %782 = vmatpush1.msra.mxu0 0.0
    %783 = vmatprep.subr.mxu0 0.0
    %784 = vmatpush1.msra.mxu0 0.0
    %785 = vmatprep.mubr.f32.mxu0 0.0
    %786 = vmatmul.mubr.f32.gmra.mrb[0].mxu0 %v716
    %v787 = vpop.f32.mrb[0].mxu0
    %v788 = vadd.f32 0.0, %v787
    %v789 = vpop.f32.mrb[0].mxu0
    %790 = vmatprep.mubr.f32.mxu0 0.0
    %791 = vmatmul.mubr.f32.gmra.mrb[0].mxu0 %v719
    %v792 = vpop.f32.mrb[0].mxu0
    %v793 = vadd.f32 0.0, %v792
    %v794 = vpop.f32.mrb[0].mxu0
    %795 = vdwg.mxu0
    %v796 = vadd.f32 %v513, %v788
    %v797 = vadd.f32 %v514, %v793
    %798 = vrot.lane.b32.xlu0 %v187, 112
    %v799 = vpop.permute.xlu0 %798
    %800 = vrot.lane.b32.xlu0 %v188, 112
    %v801 = vpop.permute.xlu0 %800
    %802 = vrot.lane.b32.xlu0 %v177, 64
    %v803 = vpop.permute.xlu0 %802
    %804 = vrot.lane.b32.xlu0 %v183, 64
    %v805 = vpop.permute.xlu0 %804
    %v806 = vsel %vm232, %v799, 0
    %v808 = vsel %vm232, %v801, 0
    %v810 = vsel %vm232, %v803, 0
    %v812 = vsel %vm232, %v805, 0
    %814 = vmatprep.subr.mxu0 0.0
    %815 = vmatpush1.xpose.msra.mxu0 %v810
    %816 = vmatprep.subr.mxu0 0.0
    %817 = vmatpush1.xpose.msra.mxu0 %v812
    %818 = vmatprep.subr.mxu0 0.0
    %819 = vmatpush1.xpose.msra.mxu0 0.0
    %820 = vmatprep.subr.mxu0 0.0
    %821 = vmatpush1.xpose.msra.mxu0 0.0
    %822 = vmatprep.subr.mxu0 0.0
    %823 = vmatpush1.xpose.msra.mxu0 0.0
    %824 = vmatprep.subr.mxu0 0.0
    %825 = vmatpush1.xpose.msra.mxu0 0.0
    %826 = vmatprep.subr.mxu0 0.0
    %827 = vmatpush1.xpose.msra.mxu0 0.0
    %828 = vmatprep.subr.mxu0 0.0
    %829 = vmatpush1.xpose.msra.mxu0 0.0
    %830 = vmatprep.subr.mxu0 0.0
    %831 = vmatpush1.xpose.msra.mxu0 0.0
    %832 = vmatprep.subr.mxu0 0.0
    %833 = vmatpush1.xpose.msra.mxu0 0.0
    %834 = vmatprep.subr.mxu0 0.0
    %835 = vmatpush1.xpose.msra.mxu0 0.0
    %836 = vmatprep.subr.mxu0 0.0
    %837 = vmatpush1.xpose.msra.mxu0 0.0
    %838 = vmatprep.subr.mxu0 0.0
    %839 = vmatpush1.xpose.msra.mxu0 0.0
    %840 = vmatprep.subr.mxu0 0.0
    %841 = vmatpush1.xpose.msra.mxu0 0.0
    %842 = vmatprep.subr.mxu0 0.0
    %843 = vmatpush1.xpose.msra.mxu0 0.0
    %844 = vmatprep.subr.mxu0 0.0
    %845 = vmatpush1.xpose.msra.mxu0 0.0
    %846 = vmatprep.subr.mxu0 0.0
    %847 = vmatpush1.xpose.msra.mxu0 0.0
    %848 = vmatprep.subr.mxu0 0.0
    %849 = vmatpush1.xpose.msra.mxu0 0.0
    %850 = vmatprep.subr.mxu0 0.0
    %851 = vmatpush1.xpose.msra.mxu0 0.0
    %852 = vmatprep.subr.mxu0 0.0
    %853 = vmatpush1.xpose.msra.mxu0 0.0
    %854 = vmatprep.subr.mxu0 0.0
    %855 = vmatpush1.xpose.msra.mxu0 0.0
    %856 = vmatprep.subr.mxu0 0.0
    %857 = vmatpush1.xpose.msra.mxu0 0.0
    %858 = vmatprep.subr.mxu0 0.0
    %859 = vmatpush1.xpose.msra.mxu0 0.0
    %860 = vmatprep.subr.mxu0 0.0
    %861 = vmatpush1.xpose.msra.mxu0 0.0
    %862 = vmatprep.subr.mxu0 0.0
    %863 = vmatpush1.xpose.msra.mxu0 0.0
    %864 = vmatprep.subr.mxu0 0.0
    %865 = vmatpush1.xpose.msra.mxu0 0.0
    %866 = vmatprep.subr.mxu0 0.0
    %867 = vmatpush1.xpose.msra.mxu0 0.0
    %868 = vmatprep.subr.mxu0 0.0
    %869 = vmatpush1.xpose.msra.mxu0 0.0
    %870 = vmatprep.subr.mxu0 0.0
    %871 = vmatpush1.xpose.msra.mxu0 0.0
    %872 = vmatprep.subr.mxu0 0.0
    %873 = vmatpush1.xpose.msra.mxu0 0.0
    %874 = vmatprep.subr.mxu0 0.0
    %875 = vmatpush1.xpose.msra.mxu0 0.0
    %876 = vmatprep.subr.mxu0 0.0
    %877 = vmatpush1.xpose.msra.mxu0 0.0
    %878 = vmatprep.mubr.f32.mxu0 0.0
    %879 = vmatmul.mubr.f32.gmra.mrb[0].mxu0 %v806
    %v880 = vpop.f32.mrb[0].mxu0
    %v881 = vadd.f32 %v218, %v880
    %v882 = vpop.f32.mrb[0].mxu0
    %883 = vmatprep.mubr.f32.mxu0 0.0
    %884 = vmatmul.mubr.f32.gmra.mrb[0].mxu0 %v808
    %v885 = vpop.f32.mrb[0].mxu0
    %v886 = vadd.f32 %v219, %v885
    %v887 = vpop.f32.mrb[0].mxu0
    %888 = vdwg.mxu0
    %v889 = vsel %vm318, %v881, -inf
    %890 = vmax.xlane.f32.xlu0 %v889
    %v891 = vpop.xlane.xlu0 %890
    %v892 = vsel %vm318, %v886, -inf
    %893 = vmax.xlane.f32.xlu0 %v892
    %v894 = vpop.xlane.xlu0 %893
    %v895 = vsub.f32 %v881, %v891
    %v896 = vsub.f32 %v886, %v894
    %v897 = vmul.f32 %v895, 1.442695
    %v898 = vpow.pop %v897
    %v899 = vmul.f32 %v896, 1.442695
    %v900 = vpow.pop %v899
    %v901 = vsel %vm318, %v898, 0.0
    %902 = vadd.xlane.f32.xlu0 %v901
    %v903 = vpop.xlane.xlu0 %902
    %v904 = vsel %vm318, %v900, 0.0
    %905 = vadd.xlane.f32.xlu0 %v904
    %v906 = vpop.xlane.xlu0 %905
    %v907 = vrcp.pop %v903
    %v908 = vrcp.pop %v906
    %v909 = vmul.f32 %v898, %v907
    %v910 = vmul.f32 %v900, %v908
    %911 = vrot.lane.b32.xlu0 %v177, 16
    %v912 = vpop.permute.xlu0 %911
    %913 = vrot.lane.b32.xlu0 %v183, 16
    %v914 = vpop.permute.xlu0 %913
    %v918 = vsel %vm318, %v909, 0
    %v921 = vsel %vm318, %v910, 0
    %923 = vmatprep.subr.mxu0 0.0
    %924 = vmatpush1.msra.mxu0 %v912
    %925 = vmatprep.subr.mxu0 0.0
    %926 = vmatpush1.msra.mxu0 %v914
    %927 = vmatprep.subr.mxu0 0.0
    %928 = vmatpush1.msra.mxu0 0.0
    %929 = vmatprep.subr.mxu0 0.0
    %930 = vmatpush1.msra.mxu0 0.0
    %931 = vmatprep.subr.mxu0 0.0
    %932 = vmatpush1.msra.mxu0 0.0
    %933 = vmatprep.subr.mxu0 0.0
    %934 = vmatpush1.msra.mxu0 0.0
    %935 = vmatprep.subr.mxu0 0.0
    %936 = vmatpush1.msra.mxu0 0.0
    %937 = vmatprep.subr.mxu0 0.0
    %938 = vmatpush1.msra.mxu0 0.0
    %939 = vmatprep.subr.mxu0 0.0
    %940 = vmatpush1.msra.mxu0 0.0
    %941 = vmatprep.subr.mxu0 0.0
    %942 = vmatpush1.msra.mxu0 0.0
    %943 = vmatprep.subr.mxu0 0.0
    %944 = vmatpush1.msra.mxu0 0.0
    %945 = vmatprep.subr.mxu0 0.0
    %946 = vmatpush1.msra.mxu0 0.0
    %947 = vmatprep.subr.mxu0 0.0
    %948 = vmatpush1.msra.mxu0 0.0
    %949 = vmatprep.subr.mxu0 0.0
    %950 = vmatpush1.msra.mxu0 0.0
    %951 = vmatprep.subr.mxu0 0.0
    %952 = vmatpush1.msra.mxu0 0.0
    %953 = vmatprep.subr.mxu0 0.0
    %954 = vmatpush1.msra.mxu0 0.0
    %955 = vmatprep.subr.mxu0 0.0
    %956 = vmatpush1.msra.mxu0 0.0
    %957 = vmatprep.subr.mxu0 0.0
    %958 = vmatpush1.msra.mxu0 0.0
    %959 = vmatprep.subr.mxu0 0.0
    %960 = vmatpush1.msra.mxu0 0.0
    %961 = vmatprep.subr.mxu0 0.0
    %962 = vmatpush1.msra.mxu0 0.0
    %963 = vmatprep.subr.mxu0 0.0
    %964 = vmatpush1.msra.mxu0 0.0
    %965 = vmatprep.subr.mxu0 0.0
    %966 = vmatpush1.msra.mxu0 0.0
    %967 = vmatprep.subr.mxu0 0.0
    %968 = vmatpush1.msra.mxu0 0.0
    %969 = vmatprep.subr.mxu0 0.0
    %970 = vmatpush1.msra.mxu0 0.0
    %971 = vmatprep.subr.mxu0 0.0
    %972 = vmatpush1.msra.mxu0 0.0
    %973 = vmatprep.subr.mxu0 0.0
    %974 = vmatpush1.msra.mxu0 0.0
    %975 = vmatprep.subr.mxu0 0.0
    %976 = vmatpush1.msra.mxu0 0.0
    %977 = vmatprep.subr.mxu0 0.0
    %978 = vmatpush1.msra.mxu0 0.0
    %979 = vmatprep.subr.mxu0 0.0
    %980 = vmatpush1.msra.mxu0 0.0
    %981 = vmatprep.subr.mxu0 0.0
    %982 = vmatpush1.msra.mxu0 0.0
    %983 = vmatprep.subr.mxu0 0.0
    %984 = vmatpush1.msra.mxu0 0.0
    %985 = vmatprep.subr.mxu0 0.0
    %986 = vmatpush1.msra.mxu0 0.0
    %987 = vmatprep.mubr.f32.mxu0 0.0
    %988 = vmatmul.mubr.f32.gmra.mrb[0].mxu0 %v918
    %v989 = vpop.f32.mrb[0].mxu0
    %v990 = vadd.f32 0.0, %v989
    %v991 = vpop.f32.mrb[0].mxu0
    %992 = vmatprep.mubr.f32.mxu0 0.0
    %993 = vmatmul.mubr.f32.gmra.mrb[0].mxu0 %v921
    %v994 = vpop.f32.mrb[0].mxu0
    %v995 = vadd.f32 0.0, %v994
    %v996 = vpop.f32.mrb[0].mxu0
    %997 = vdwg.mxu0
    %v999 = vsel %vm232, %v990, 0
    %v1002 = vsel %vm232, %v995, 0
    %1004 = vmatprep.subr.mxu0 0.0
    %1005 = vmatpush1.msra.mxu0 %v222
    %1006 = vmatprep.subr.mxu0 0.0
    %1007 = vmatpush1.msra.mxu0 0.0
    %1008 = vmatprep.subr.mxu0 0.0
    %1009 = vmatpush1.msra.mxu0 0.0
    %1010 = vmatprep.subr.mxu0 0.0
    %1011 = vmatpush1.msra.mxu0 0.0
    %1012 = vmatprep.subr.mxu0 0.0
    %1013 = vmatpush1.msra.mxu0 0.0
    %1014 = vmatprep.subr.mxu0 0.0
    %1015 = vmatpush1.msra.mxu0 0.0
    %1016 = vmatprep.subr.mxu0 0.0
    %1017 = vmatpush1.msra.mxu0 0.0
    %1018 = vmatprep.subr.mxu0 0.0
    %1019 = vmatpush1.msra.mxu0 0.0
    %1020 = vmatprep.subr.mxu0 0.0
    %1021 = vmatpush1.msra.mxu0 0.0
    %1022 = vmatprep.subr.mxu0 0.0
    %1023 = vmatpush1.msra.mxu0 0.0
    %1024 = vmatprep.subr.mxu0 0.0
    %1025 = vmatpush1.msra.mxu0 0.0
    %1026 = vmatprep.subr.mxu0 0.0
    %1027 = vmatpush1.msra.mxu0 0.0
    %1028 = vmatprep.subr.mxu0 0.0
    %1029 = vmatpush1.msra.mxu0 0.0
    %1030 = vmatprep.subr.mxu0 0.0
    %1031 = vmatpush1.msra.mxu0 0.0
    %1032 = vmatprep.subr.mxu0 0.0
    %1033 = vmatpush1.msra.mxu0 0.0
    %1034 = vmatprep.subr.mxu0 0.0
    %1035 = vmatpush1.msra.mxu0 0.0
    %1036 = vmatprep.subr.mxu0 0.0
    %1037 = vmatpush1.msra.mxu0 0.0
    %1038 = vmatprep.subr.mxu0 0.0
    %1039 = vmatpush1.msra.mxu0 0.0
    %1040 = vmatprep.subr.mxu0 0.0
    %1041 = vmatpush1.msra.mxu0 0.0
    %1042 = vmatprep.subr.mxu0 0.0
    %1043 = vmatpush1.msra.mxu0 0.0
    %1044 = vmatprep.subr.mxu0 0.0
    %1045 = vmatpush1.msra.mxu0 0.0
    %1046 = vmatprep.subr.mxu0 0.0
    %1047 = vmatpush1.msra.mxu0 0.0
    %1048 = vmatprep.subr.mxu0 0.0
    %1049 = vmatpush1.msra.mxu0 0.0
    %1050 = vmatprep.subr.mxu0 0.0
    %1051 = vmatpush1.msra.mxu0 0.0
    %1052 = vmatprep.subr.mxu0 0.0
    %1053 = vmatpush1.msra.mxu0 0.0
    %1054 = vmatprep.subr.mxu0 0.0
    %1055 = vmatpush1.msra.mxu0 0.0
    %1056 = vmatprep.subr.mxu0 0.0
    %1057 = vmatpush1.msra.mxu0 0.0
    %1058 = vmatprep.subr.mxu0 0.0
    %1059 = vmatpush1.msra.mxu0 0.0
    %1060 = vmatprep.subr.mxu0 0.0
    %1061 = vmatpush1.msra.mxu0 0.0
    %1062 = vmatprep.subr.mxu0 0.0
    %1063 = vmatpush1.msra.mxu0 0.0
    %1064 = vmatprep.subr.mxu0 0.0
    %1065 = vmatpush1.msra.mxu0 0.0
    %1066 = vmatprep.subr.mxu0 0.0
    %1067 = vmatpush1.msra.mxu0 0.0
    %1068 = vmatprep.mubr.f32.mxu0 0.0
    %1069 = vmatmul.mubr.f32.gmra.mrb[0].mxu0 %v999
    %v1070 = vpop.f32.mrb[0].mxu0
    %v1071 = vadd.f32 0.0, %v1070
    %v1072 = vpop.f32.mrb[0].mxu0
    %1073 = vmatprep.mubr.f32.mxu0 0.0
    %1074 = vmatmul.mubr.f32.gmra.mrb[0].mxu0 %v1002
    %v1075 = vpop.f32.mrb[0].mxu0
    %v1076 = vadd.f32 0.0, %v1075
    %v1077 = vpop.f32.mrb[0].mxu0
    %1078 = vdwg.mxu0
    %v1079 = vadd.f32 %v796, %v1071
    %v1080 = vadd.f32 %v797, %v1076
    %1081 = vrot.lane.b32.xlu0 %v187, 104
    %v1082 = vpop.permute.xlu0 %1081
    %1083 = vrot.lane.b32.xlu0 %v188, 104
    %v1084 = vpop.permute.xlu0 %1083
    %1085 = vrot.lane.b32.xlu0 %v177, 56
    %v1086 = vpop.permute.xlu0 %1085
    %1087 = vrot.lane.b32.xlu0 %v183, 56
    %v1088 = vpop.permute.xlu0 %1087
    %v1089 = vsel %vm232, %v1082, 0
    %v1091 = vsel %vm232, %v1084, 0
    %v1093 = vsel %vm232, %v1086, 0
    %v1095 = vsel %vm232, %v1088, 0
    %1097 = vmatprep.subr.mxu0 0.0
    %1098 = vmatpush1.xpose.msra.mxu0 %v1093
    %1099 = vmatprep.subr.mxu0 0.0
    %1100 = vmatpush1.xpose.msra.mxu0 %v1095
    %1101 = vmatprep.subr.mxu0 0.0
    %1102 = vmatpush1.xpose.msra.mxu0 0.0
    %1103 = vmatprep.subr.mxu0 0.0
    %1104 = vmatpush1.xpose.msra.mxu0 0.0
    %1105 = vmatprep.subr.mxu0 0.0
    %1106 = vmatpush1.xpose.msra.mxu0 0.0
    %1107 = vmatprep.subr.mxu0 0.0
    %1108 = vmatpush1.xpose.msra.mxu0 0.0
    %1109 = vmatprep.subr.mxu0 0.0
    %1110 = vmatpush1.xpose.msra.mxu0 0.0
    %1111 = vmatprep.subr.mxu0 0.0
    %1112 = vmatpush1.xpose.msra.mxu0 0.0
    %1113 = vmatprep.subr.mxu0 0.0
    %1114 = vmatpush1.xpose.msra.mxu0 0.0
    %1115 = vmatprep.subr.mxu0 0.0
    %1116 = vmatpush1.xpose.msra.mxu0 0.0
    %1117 = vmatprep.subr.mxu0 0.0
    %1118 = vmatpush1.xpose.msra.mxu0 0.0
    %1119 = vmatprep.subr.mxu0 0.0
    %1120 = vmatpush1.xpose.msra.mxu0 0.0
    %1121 = vmatprep.subr.mxu0 0.0
    %1122 = vmatpush1.xpose.msra.mxu0 0.0
    %1123 = vmatprep.subr.mxu0 0.0
    %1124 = vmatpush1.xpose.msra.mxu0 0.0
    %1125 = vmatprep.subr.mxu0 0.0
    %1126 = vmatpush1.xpose.msra.mxu0 0.0
    %1127 = vmatprep.subr.mxu0 0.0
    %1128 = vmatpush1.xpose.msra.mxu0 0.0
    %1129 = vmatprep.subr.mxu0 0.0
    %1130 = vmatpush1.xpose.msra.mxu0 0.0
    %1131 = vmatprep.subr.mxu0 0.0
    %1132 = vmatpush1.xpose.msra.mxu0 0.0
    %1133 = vmatprep.subr.mxu0 0.0
    %1134 = vmatpush1.xpose.msra.mxu0 0.0
    %1135 = vmatprep.subr.mxu0 0.0
    %1136 = vmatpush1.xpose.msra.mxu0 0.0
    %1137 = vmatprep.subr.mxu0 0.0
    %1138 = vmatpush1.xpose.msra.mxu0 0.0
    %1139 = vmatprep.subr.mxu0 0.0
    %1140 = vmatpush1.xpose.msra.mxu0 0.0
    %1141 = vmatprep.subr.mxu0 0.0
    %1142 = vmatpush1.xpose.msra.mxu0 0.0
    %1143 = vmatprep.subr.mxu0 0.0
    %1144 = vmatpush1.xpose.msra.mxu0 0.0
    %1145 = vmatprep.subr.mxu0 0.0
    %1146 = vmatpush1.xpose.msra.mxu0 0.0
    %1147 = vmatprep.subr.mxu0 0.0
    %1148 = vmatpush1.xpose.msra.mxu0 0.0
    %1149 = vmatprep.subr.mxu0 0.0
    %1150 = vmatpush1.xpose.msra.mxu0 0.0
    %1151 = vmatprep.subr.mxu0 0.0
    %1152 = vmatpush1.xpose.msra.mxu0 0.0
    %1153 = vmatprep.subr.mxu0 0.0
    %1154 = vmatpush1.xpose.msra.mxu0 0.0
    %1155 = vmatprep.subr.mxu0 0.0
    %1156 = vmatpush1.xpose.msra.mxu0 0.0
    %1157 = vmatprep.subr.mxu0 0.0
    %1158 = vmatpush1.xpose.msra.mxu0 0.0
    %1159 = vmatprep.subr.mxu0 0.0
    %1160 = vmatpush1.xpose.msra.mxu0 0.0
    %1161 = vmatprep.mubr.f32.mxu0 0.0
    %1162 = vmatmul.mubr.f32.gmra.mrb[0].mxu0 %v1089
    %v1163 = vpop.f32.mrb[0].mxu0
    %v1164 = vadd.f32 %v218, %v1163
    %v1165 = vpop.f32.mrb[0].mxu0
    %1166 = vmatprep.mubr.f32.mxu0 0.0
    %1167 = vmatmul.mubr.f32.gmra.mrb[0].mxu0 %v1091
    %v1168 = vpop.f32.mrb[0].mxu0
    %v1169 = vadd.f32 %v219, %v1168
    %v1170 = vpop.f32.mrb[0].mxu0
    %1171 = vdwg.mxu0
    %v1172 = vsel %vm318, %v1164, -inf
    %1173 = vmax.xlane.f32.xlu0 %v1172
    %v1174 = vpop.xlane.xlu0 %1173
    %v1175 = vsel %vm318, %v1169, -inf
    %1176 = vmax.xlane.f32.xlu0 %v1175
    %v1177 = vpop.xlane.xlu0 %1176
    %v1178 = vsub.f32 %v1164, %v1174
    %v1179 = vsub.f32 %v1169, %v1177
    %v1180 = vmul.f32 %v1178, 1.442695
    %v1181 = vpow.pop %v1180
    %v1182 = vmul.f32 %v1179, 1.442695
    %v1183 = vpow.pop %v1182
    %v1184 = vsel %vm318, %v1181, 0.0
    %1185 = vadd.xlane.f32.xlu0 %v1184
    %v1186 = vpop.xlane.xlu0 %1185
    %v1187 = vsel %vm318, %v1183, 0.0
    %1188 = vadd.xlane.f32.xlu0 %v1187
    %v1189 = vpop.xlane.xlu0 %1188
    %v1190 = vrcp.pop %v1186
    %v1191 = vrcp.pop %v1189
    %v1192 = vmul.f32 %v1181, %v1190
    %v1193 = vmul.f32 %v1183, %v1191
    %1194 = vrot.lane.b32.xlu0 %v177, 8
    %v1195 = vpop.permute.xlu0 %1194
    %1196 = vrot.lane.b32.xlu0 %v183, 8
    %v1197 = vpop.permute.xlu0 %1196
    %v1201 = vsel %vm318, %v1192, 0
    %v1204 = vsel %vm318, %v1193, 0
    %1206 = vmatprep.subr.mxu0 0.0
    %1207 = vmatpush1.msra.mxu0 %v1195
    %1208 = vmatprep.subr.mxu0 0.0
    %1209 = vmatpush1.msra.mxu0 %v1197
    %1210 = vmatprep.subr.mxu0 0.0
    %1211 = vmatpush1.msra.mxu0 0.0
    %1212 = vmatprep.subr.mxu0 0.0
    %1213 = vmatpush1.msra.mxu0 0.0
    %1214 = vmatprep.subr.mxu0 0.0
    %1215 = vmatpush1.msra.mxu0 0.0
    %1216 = vmatprep.subr.mxu0 0.0
    %1217 = vmatpush1.msra.mxu0 0.0
    %1218 = vmatprep.subr.mxu0 0.0
    %1219 = vmatpush1.msra.mxu0 0.0
    %1220 = vmatprep.subr.mxu0 0.0
    %1221 = vmatpush1.msra.mxu0 0.0
    %1222 = vmatprep.subr.mxu0 0.0
    %1223 = vmatpush1.msra.mxu0 0.0
    %1224 = vmatprep.subr.mxu0 0.0
    %1225 = vmatpush1.msra.mxu0 0.0
    %1226 = vmatprep.subr.mxu0 0.0
    %1227 = vmatpush1.msra.mxu0 0.0
    %1228 = vmatprep.subr.mxu0 0.0
    %1229 = vmatpush1.msra.mxu0 0.0
    %1230 = vmatprep.subr.mxu0 0.0
    %1231 = vmatpush1.msra.mxu0 0.0
    %1232 = vmatprep.subr.mxu0 0.0
    %1233 = vmatpush1.msra.mxu0 0.0
    %1234 = vmatprep.subr.mxu0 0.0
    %1235 = vmatpush1.msra.mxu0 0.0
    %1236 = vmatprep.subr.mxu0 0.0
    %1237 = vmatpush1.msra.mxu0 0.0
    %1238 = vmatprep.subr.mxu0 0.0
    %1239 = vmatpush1.msra.mxu0 0.0
    %1240 = vmatprep.subr.mxu0 0.0
    %1241 = vmatpush1.msra.mxu0 0.0
    %1242 = vmatprep.subr.mxu0 0.0
    %1243 = vmatpush1.msra.mxu0 0.0
    %1244 = vmatprep.subr.mxu0 0.0
    %1245 = vmatpush1.msra.mxu0 0.0
    %1246 = vmatprep.subr.mxu0 0.0
    %1247 = vmatpush1.msra.mxu0 0.0
    %1248 = vmatprep.subr.mxu0 0.0
    %1249 = vmatpush1.msra.mxu0 0.0
    %1250 = vmatprep.subr.mxu0 0.0
    %1251 = vmatpush1.msra.mxu0 0.0
    %1252 = vmatprep.subr.mxu0 0.0
    %1253 = vmatpush1.msra.mxu0 0.0
    %1254 = vmatprep.subr.mxu0 0.0
    %1255 = vmatpush1.msra.mxu0 0.0
    %1256 = vmatprep.subr.mxu0 0.0
    %1257 = vmatpush1.msra.mxu0 0.0
    %1258 = vmatprep.subr.mxu0 0.0
    %1259 = vmatpush1.msra.mxu0 0.0
    %1260 = vmatprep.subr.mxu0 0.0
    %1261 = vmatpush1.msra.mxu0 0.0
    %1262 = vmatprep.subr.mxu0 0.0
    %1263 = vmatpush1.msra.mxu0 0.0
    %1264 = vmatprep.subr.mxu0 0.0
    %1265 = vmatpush1.msra.mxu0 0.0
    %1266 = vmatprep.subr.mxu0 0.0
    %1267 = vmatpush1.msra.mxu0 0.0
    %1268 = vmatprep.subr.mxu0 0.0
    %1269 = vmatpush1.msra.mxu0 0.0
    %1270 = vmatprep.mubr.f32.mxu0 0.0
    %1271 = vmatmul.mubr.f32.gmra.mrb[0].mxu0 %v1201
    %v1272 = vpop.f32.mrb[0].mxu0
    %v1273 = vadd.f32 0.0, %v1272
    %v1274 = vpop.f32.mrb[0].mxu0
    %1275 = vmatprep.mubr.f32.mxu0 0.0
    %1276 = vmatmul.mubr.f32.gmra.mrb[0].mxu0 %v1204
    %v1277 = vpop.f32.mrb[0].mxu0
    %v1278 = vadd.f32 0.0, %v1277
    %v1279 = vpop.f32.mrb[0].mxu0
    %1280 = vdwg.mxu0
    %v1282 = vsel %vm232, %v1273, 0
    %v1285 = vsel %vm232, %v1278, 0
    %1287 = vmatprep.subr.mxu0 0.0
    %1288 = vmatpush1.msra.mxu0 %v223
    %1289 = vmatprep.subr.mxu0 0.0
    %1290 = vmatpush1.msra.mxu0 0.0
    %1291 = vmatprep.subr.mxu0 0.0
    %1292 = vmatpush1.msra.mxu0 0.0
    %1293 = vmatprep.subr.mxu0 0.0
    %1294 = vmatpush1.msra.mxu0 0.0
    %1295 = vmatprep.subr.mxu0 0.0
    %1296 = vmatpush1.msra.mxu0 0.0
    %1297 = vmatprep.subr.mxu0 0.0
    %1298 = vmatpush1.msra.mxu0 0.0
    %1299 = vmatprep.subr.mxu0 0.0
    %1300 = vmatpush1.msra.mxu0 0.0
    %1301 = vmatprep.subr.mxu0 0.0
    %1302 = vmatpush1.msra.mxu0 0.0
    %1303 = vmatprep.subr.mxu0 0.0
    %1304 = vmatpush1.msra.mxu0 0.0
    %1305 = vmatprep.subr.mxu0 0.0
    %1306 = vmatpush1.msra.mxu0 0.0
    %1307 = vmatprep.subr.mxu0 0.0
    %1308 = vmatpush1.msra.mxu0 0.0
    %1309 = vmatprep.subr.mxu0 0.0
    %1310 = vmatpush1.msra.mxu0 0.0
    %1311 = vmatprep.subr.mxu0 0.0
    %1312 = vmatpush1.msra.mxu0 0.0
    %1313 = vmatprep.subr.mxu0 0.0
    %1314 = vmatpush1.msra.mxu0 0.0
    %1315 = vmatprep.subr.mxu0 0.0
    %1316 = vmatpush1.msra.mxu0 0.0
    %1317 = vmatprep.subr.mxu0 0.0
    %1318 = vmatpush1.msra.mxu0 0.0
    %1319 = vmatprep.subr.mxu0 0.0
    %1320 = vmatpush1.msra.mxu0 0.0
    %1321 = vmatprep.subr.mxu0 0.0
    %1322 = vmatpush1.msra.mxu0 0.0
    %1323 = vmatprep.subr.mxu0 0.0
    %1324 = vmatpush1.msra.mxu0 0.0
    %1325 = vmatprep.subr.mxu0 0.0
    %1326 = vmatpush1.msra.mxu0 0.0
    %1327 = vmatprep.subr.mxu0 0.0
    %1328 = vmatpush1.msra.mxu0 0.0
    %1329 = vmatprep.subr.mxu0 0.0
    %1330 = vmatpush1.msra.mxu0 0.0
    %1331 = vmatprep.subr.mxu0 0.0
    %1332 = vmatpush1.msra.mxu0 0.0
    %1333 = vmatprep.subr.mxu0 0.0
    %1334 = vmatpush1.msra.mxu0 0.0
    %1335 = vmatprep.subr.mxu0 0.0
    %1336 = vmatpush1.msra.mxu0 0.0
    %1337 = vmatprep.subr.mxu0 0.0
    %1338 = vmatpush1.msra.mxu0 0.0
    %1339 = vmatprep.subr.mxu0 0.0
    %1340 = vmatpush1.msra.mxu0 0.0
    %1341 = vmatprep.subr.mxu0 0.0
    %1342 = vmatpush1.msra.mxu0 0.0
    %1343 = vmatprep.subr.mxu0 0.0
    %1344 = vmatpush1.msra.mxu0 0.0
    %1345 = vmatprep.subr.mxu0 0.0
    %1346 = vmatpush1.msra.mxu0 0.0
    %1347 = vmatprep.subr.mxu0 0.0
    %1348 = vmatpush1.msra.mxu0 0.0
    %1349 = vmatprep.subr.mxu0 0.0
    %1350 = vmatpush1.msra.mxu0 0.0
    %1351 = vmatprep.mubr.f32.mxu0 0.0
    %1352 = vmatmul.mubr.f32.gmra.mrb[0].mxu0 %v1282
    %v1353 = vpop.f32.mrb[0].mxu0
    %v1354 = vadd.f32 0.0, %v1353
    %v1355 = vpop.f32.mrb[0].mxu0
    %1356 = vmatprep.mubr.f32.mxu0 0.0
    %1357 = vmatmul.mubr.f32.gmra.mrb[0].mxu0 %v1285
    %v1358 = vpop.f32.mrb[0].mxu0
    %v1359 = vadd.f32 0.0, %v1358
    %v1360 = vpop.f32.mrb[0].mxu0
    %1361 = vdwg.mxu0
    %v1362 = vadd.f32 %v1079, %v1354
    %v1363 = vadd.f32 %v1080, %v1359
    %1364 = vrot.lane.b32.xlu0 %v187, 96
    %v1365 = vpop.permute.xlu0 %1364
    %1366 = vrot.lane.b32.xlu0 %v188, 96
    %v1367 = vpop.permute.xlu0 %1366
    %1368 = vrot.lane.b32.xlu0 %v177, 48
    %v1369 = vpop.permute.xlu0 %1368
    %1370 = vrot.lane.b32.xlu0 %v183, 48
    %v1371 = vpop.permute.xlu0 %1370
    %v1372 = vsel %vm232, %v1365, 0
    %v1374 = vsel %vm232, %v1367, 0
    %v1376 = vsel %vm232, %v1369, 0
    %v1378 = vsel %vm232, %v1371, 0
    %1380 = vmatprep.subr.mxu0 0.0
    %1381 = vmatpush1.xpose.msra.mxu0 %v1376
    %1382 = vmatprep.subr.mxu0 0.0
    %1383 = vmatpush1.xpose.msra.mxu0 %v1378
    %1384 = vmatprep.subr.mxu0 0.0
    %1385 = vmatpush1.xpose.msra.mxu0 0.0
    %1386 = vmatprep.subr.mxu0 0.0
    %1387 = vmatpush1.xpose.msra.mxu0 0.0
    %1388 = vmatprep.subr.mxu0 0.0
    %1389 = vmatpush1.xpose.msra.mxu0 0.0
    %1390 = vmatprep.subr.mxu0 0.0
    %1391 = vmatpush1.xpose.msra.mxu0 0.0
    %1392 = vmatprep.subr.mxu0 0.0
    %1393 = vmatpush1.xpose.msra.mxu0 0.0
    %1394 = vmatprep.subr.mxu0 0.0
    %1395 = vmatpush1.xpose.msra.mxu0 0.0
    %1396 = vmatprep.subr.mxu0 0.0
    %1397 = vmatpush1.xpose.msra.mxu0 0.0
    %1398 = vmatprep.subr.mxu0 0.0
    %1399 = vmatpush1.xpose.msra.mxu0 0.0
    %1400 = vmatprep.subr.mxu0 0.0
    %1401 = vmatpush1.xpose.msra.mxu0 0.0
    %1402 = vmatprep.subr.mxu0 0.0
    %1403 = vmatpush1.xpose.msra.mxu0 0.0
    %1404 = vmatprep.subr.mxu0 0.0
    %1405 = vmatpush1.xpose.msra.mxu0 0.0
    %1406 = vmatprep.subr.mxu0 0.0
    %1407 = vmatpush1.xpose.msra.mxu0 0.0
    %1408 = vmatprep.subr.mxu0 0.0
    %1409 = vmatpush1.xpose.msra.mxu0 0.0
    %1410 = vmatprep.subr.mxu0 0.0
    %1411 = vmatpush1.xpose.msra.mxu0 0.0
    %1412 = vmatprep.subr.mxu0 0.0
    %1413 = vmatpush1.xpose.msra.mxu0 0.0
    %1414 = vmatprep.subr.mxu0 0.0
    %1415 = vmatpush1.xpose.msra.mxu0 0.0
    %1416 = vmatprep.subr.mxu0 0.0
    %1417 = vmatpush1.xpose.msra.mxu0 0.0
    %1418 = vmatprep.subr.mxu0 0.0
    %1419 = vmatpush1.xpose.msra.mxu0 0.0
    %1420 = vmatprep.subr.mxu0 0.0
    %1421 = vmatpush1.xpose.msra.mxu0 0.0
    %1422 = vmatprep.subr.mxu0 0.0
    %1423 = vmatpush1.xpose.msra.mxu0 0.0
    %1424 = vmatprep.subr.mxu0 0.0
    %1425 = vmatpush1.xpose.msra.mxu0 0.0
    %1426 = vmatprep.subr.mxu0 0.0
    %1427 = vmatpush1.xpose.msra.mxu0 0.0
    %1428 = vmatprep.subr.mxu0 0.0
    %1429 = vmatpush1.xpose.msra.mxu0 0.0
    %1430 = vmatprep.subr.mxu0 0.0
    %1431 = vmatpush1.xpose.msra.mxu0 0.0
    %1432 = vmatprep.subr.mxu0 0.0
    %1433 = vmatpush1.xpose.msra.mxu0 0.0
    %1434 = vmatprep.subr.mxu0 0.0
    %1435 = vmatpush1.xpose.msra.mxu0 0.0
    %1436 = vmatprep.subr.mxu0 0.0
    %1437 = vmatpush1.xpose.msra.mxu0 0.0
    %1438 = vmatprep.subr.mxu0 0.0
    %1439 = vmatpush1.xpose.msra.mxu0 0.0
    %1440 = vmatprep.subr.mxu0 0.0
    %1441 = vmatpush1.xpose.msra.mxu0 0.0
    %1442 = vmatprep.subr.mxu0 0.0
    %1443 = vmatpush1.xpose.msra.mxu0 0.0
    %1444 = vmatprep.mubr.f32.mxu0 0.0
    %1445 = vmatmul.mubr.f32.gmra.mrb[0].mxu0 %v1372
    %v1446 = vpop.f32.mrb[0].mxu0
    %v1447 = vadd.f32 %v218, %v1446
    %v1448 = vpop.f32.mrb[0].mxu0
    %1449 = vmatprep.mubr.f32.mxu0 0.0
    %1450 = vmatmul.mubr.f32.gmra.mrb[0].mxu0 %v1374
    %v1451 = vpop.f32.mrb[0].mxu0
    %v1452 = vadd.f32 %v219, %v1451
    %v1453 = vpop.f32.mrb[0].mxu0
    %1454 = vdwg.mxu0
    %v1455 = vsel %vm318, %v1447, -inf
    %1456 = vmax.xlane.f32.xlu0 %v1455
    %v1457 = vpop.xlane.xlu0 %1456
    %v1458 = vsel %vm318, %v1452, -inf
    %1459 = vmax.xlane.f32.xlu0 %v1458
    %v1460 = vpop.xlane.xlu0 %1459
    %v1461 = vsub.f32 %v1447, %v1457
    %v1462 = vsub.f32 %v1452, %v1460
    %v1463 = vmul.f32 %v1461, 1.442695
    %v1464 = vpow.pop %v1463
    %v1465 = vmul.f32 %v1462, 1.442695
    %v1466 = vpow.pop %v1465
    %v1467 = vsel %vm318, %v1464, 0.0
    %1468 = vadd.xlane.f32.xlu0 %v1467
    %v1469 = vpop.xlane.xlu0 %1468
    %v1470 = vsel %vm318, %v1466, 0.0
    %1471 = vadd.xlane.f32.xlu0 %v1470
    %v1472 = vpop.xlane.xlu0 %1471
    %v1473 = vrcp.pop %v1469
    %v1474 = vrcp.pop %v1472
    %v1475 = vmul.f32 %v1464, %v1473
    %v1476 = vmul.f32 %v1466, %v1474
    %v1478 = vsel %vm318, %v1475, 0
    %v1481 = vsel %vm318, %v1476, 0
    %1483 = vmatprep.subr.mxu0 0.0
    %1484 = vmatpush1.msra.mxu0 %v179
    %1485 = vmatprep.subr.mxu0 0.0
    %1486 = vmatpush1.msra.mxu0 %v185
    %1487 = vmatprep.subr.mxu0 0.0
    %1488 = vmatpush1.msra.mxu0 0.0
    %1489 = vmatprep.subr.mxu0 0.0
    %1490 = vmatpush1.msra.mxu0 0.0
    %1491 = vmatprep.subr.mxu0 0.0
    %1492 = vmatpush1.msra.mxu0 0.0
    %1493 = vmatprep.subr.mxu0 0.0
    %1494 = vmatpush1.msra.mxu0 0.0
    %1495 = vmatprep.subr.mxu0 0.0
    %1496 = vmatpush1.msra.mxu0 0.0
    %1497 = vmatprep.subr.mxu0 0.0
    %1498 = vmatpush1.msra.mxu0 0.0
    %1499 = vmatprep.subr.mxu0 0.0
    %1500 = vmatpush1.msra.mxu0 0.0
    %1501 = vmatprep.subr.mxu0 0.0
    %1502 = vmatpush1.msra.mxu0 0.0
    %1503 = vmatprep.subr.mxu0 0.0
    %1504 = vmatpush1.msra.mxu0 0.0
    %1505 = vmatprep.subr.mxu0 0.0
    %1506 = vmatpush1.msra.mxu0 0.0
    %1507 = vmatprep.subr.mxu0 0.0
    %1508 = vmatpush1.msra.mxu0 0.0
    %1509 = vmatprep.subr.mxu0 0.0
    %1510 = vmatpush1.msra.mxu0 0.0
    %1511 = vmatprep.subr.mxu0 0.0
    %1512 = vmatpush1.msra.mxu0 0.0
    %1513 = vmatprep.subr.mxu0 0.0
    %1514 = vmatpush1.msra.mxu0 0.0
    %1515 = vmatprep.subr.mxu0 0.0
    %1516 = vmatpush1.msra.mxu0 0.0
    %1517 = vmatprep.subr.mxu0 0.0
    %1518 = vmatpush1.msra.mxu0 0.0
    %1519 = vmatprep.subr.mxu0 0.0
    %1520 = vmatpush1.msra.mxu0 0.0
    %1521 = vmatprep.subr.mxu0 0.0
    %1522 = vmatpush1.msra.mxu0 0.0
    %1523 = vmatprep.subr.mxu0 0.0
    %1524 = vmatpush1.msra.mxu0 0.0
    %1525 = vmatprep.subr.mxu0 0.0
    %1526 = vmatpush1.msra.mxu0 0.0
    %1527 = vmatprep.subr.mxu0 0.0
    %1528 = vmatpush1.msra.mxu0 0.0
    %1529 = vmatprep.subr.mxu0 0.0
    %1530 = vmatpush1.msra.mxu0 0.0
    %1531 = vmatprep.subr.mxu0 0.0
    %1532 = vmatpush1.msra.mxu0 0.0
    %1533 = vmatprep.subr.mxu0 0.0
    %1534 = vmatpush1.msra.mxu0 0.0
    %1535 = vmatprep.subr.mxu0 0.0
    %1536 = vmatpush1.msra.mxu0 0.0
    %1537 = vmatprep.subr.mxu0 0.0
    %1538 = vmatpush1.msra.mxu0 0.0
    %1539 = vmatprep.subr.mxu0 0.0
    %1540 = vmatpush1.msra.mxu0 0.0
    %1541 = vmatprep.subr.mxu0 0.0
    %1542 = vmatpush1.msra.mxu0 0.0
    %1543 = vmatprep.subr.mxu0 0.0
    %1544 = vmatpush1.msra.mxu0 0.0
    %1545 = vmatprep.subr.mxu0 0.0
    %1546 = vmatpush1.msra.mxu0 0.0
    %1547 = vmatprep.mubr.f32.mxu0 0.0
    %1548 = vmatmul.mubr.f32.gmra.mrb[0].mxu0 %v1478
    %v1549 = vpop.f32.mrb[0].mxu0
    %v1550 = vadd.f32 0.0, %v1549
    %v1551 = vpop.f32.mrb[0].mxu0
    %1552 = vmatprep.mubr.f32.mxu0 0.0
    %1553 = vmatmul.mubr.f32.gmra.mrb[0].mxu0 %v1481
    %v1554 = vpop.f32.mrb[0].mxu0
    %v1555 = vadd.f32 0.0, %v1554
    %v1556 = vpop.f32.mrb[0].mxu0
    %1557 = vdwg.mxu0
    %v1559 = vsel %vm232, %v1550, 0
    %v1562 = vsel %vm232, %v1555, 0
    %1564 = vmatprep.subr.mxu0 0.0
    %1565 = vmatpush1.msra.mxu0 %v224
    %1566 = vmatprep.subr.mxu0 0.0
    %1567 = vmatpush1.msra.mxu0 0.0
    %1568 = vmatprep.subr.mxu0 0.0
    %1569 = vmatpush1.msra.mxu0 0.0
    %1570 = vmatprep.subr.mxu0 0.0
    %1571 = vmatpush1.msra.mxu0 0.0
    %1572 = vmatprep.subr.mxu0 0.0
    %1573 = vmatpush1.msra.mxu0 0.0
    %1574 = vmatprep.subr.mxu0 0.0
    %1575 = vmatpush1.msra.mxu0 0.0
    %1576 = vmatprep.subr.mxu0 0.0
    %1577 = vmatpush1.msra.mxu0 0.0
    %1578 = vmatprep.subr.mxu0 0.0
    %1579 = vmatpush1.msra.mxu0 0.0
    %1580 = vmatprep.subr.mxu0 0.0
    %1581 = vmatpush1.msra.mxu0 0.0
    %1582 = vmatprep.subr.mxu0 0.0
    %1583 = vmatpush1.msra.mxu0 0.0
    %1584 = vmatprep.subr.mxu0 0.0
    %1585 = vmatpush1.msra.mxu0 0.0
    %1586 = vmatprep.subr.mxu0 0.0
    %1587 = vmatpush1.msra.mxu0 0.0
    %1588 = vmatprep.subr.mxu0 0.0
    %1589 = vmatpush1.msra.mxu0 0.0
    %1590 = vmatprep.subr.mxu0 0.0
    %1591 = vmatpush1.msra.mxu0 0.0
    %1592 = vmatprep.subr.mxu0 0.0
    %1593 = vmatpush1.msra.mxu0 0.0
    %1594 = vmatprep.subr.mxu0 0.0
    %1595 = vmatpush1.msra.mxu0 0.0
    %1596 = vmatprep.subr.mxu0 0.0
    %1597 = vmatpush1.msra.mxu0 0.0
    %1598 = vmatprep.subr.mxu0 0.0
    %1599 = vmatpush1.msra.mxu0 0.0
    %1600 = vmatprep.subr.mxu0 0.0
    %1601 = vmatpush1.msra.mxu0 0.0
    %1602 = vmatprep.subr.mxu0 0.0
    %1603 = vmatpush1.msra.mxu0 0.0
    %1604 = vmatprep.subr.mxu0 0.0
    %1605 = vmatpush1.msra.mxu0 0.0
    %1606 = vmatprep.subr.mxu0 0.0
    %1607 = vmatpush1.msra.mxu0 0.0
    %1608 = vmatprep.subr.mxu0 0.0
    %1609 = vmatpush1.msra.mxu0 0.0
    %1610 = vmatprep.subr.mxu0 0.0
    %1611 = vmatpush1.msra.mxu0 0.0
    %1612 = vmatprep.subr.mxu0 0.0
    %1613 = vmatpush1.msra.mxu0 0.0
    %1614 = vmatprep.subr.mxu0 0.0
    %1615 = vmatpush1.msra.mxu0 0.0
    %1616 = vmatprep.subr.mxu0 0.0
    %1617 = vmatpush1.msra.mxu0 0.0
    %1618 = vmatprep.subr.mxu0 0.0
    %1619 = vmatpush1.msra.mxu0 0.0
    %1620 = vmatprep.subr.mxu0 0.0
    %1621 = vmatpush1.msra.mxu0 0.0
    %1622 = vmatprep.subr.mxu0 0.0
    %1623 = vmatpush1.msra.mxu0 0.0
    %1624 = vmatprep.subr.mxu0 0.0
    %1625 = vmatpush1.msra.mxu0 0.0
    %1626 = vmatprep.subr.mxu0 0.0
    %1627 = vmatpush1.msra.mxu0 0.0
    %1628 = vmatprep.mubr.f32.mxu0 0.0
    %1629 = vmatmul.mubr.f32.gmra.mrb[0].mxu0 %v1559
    %v1630 = vpop.f32.mrb[0].mxu0
    %v1631 = vadd.f32 0.0, %v1630
    %v1632 = vpop.f32.mrb[0].mxu0
    %1633 = vmatprep.mubr.f32.mxu0 0.0
    %1634 = vmatmul.mubr.f32.gmra.mrb[0].mxu0 %v1562
    %v1635 = vpop.f32.mrb[0].mxu0
    %v1636 = vadd.f32 0.0, %v1635
    %v1637 = vpop.f32.mrb[0].mxu0
    %1638 = vdwg.mxu0
    %v1639 = vadd.f32 %v1362, %v1631
    %v1640 = vadd.f32 %v1363, %v1636
    %1641 = vrot.lane.b32.xlu0 %v187, 88
    %v1642 = vpop.permute.xlu0 %1641
    %1643 = vrot.lane.b32.xlu0 %v188, 88
    %v1644 = vpop.permute.xlu0 %1643
    %1645 = vrot.lane.b32.xlu0 %v177, 40
    %v1646 = vpop.permute.xlu0 %1645
    %1647 = vrot.lane.b32.xlu0 %v183, 40
    %v1648 = vpop.permute.xlu0 %1647
    %v1649 = vsel %vm232, %v1642, 0
    %v1651 = vsel %vm232, %v1644, 0
    %v1653 = vsel %vm232, %v1646, 0
    %v1655 = vsel %vm232, %v1648, 0
    %1657 = vmatprep.subr.mxu0 0.0
    %1658 = vmatpush1.xpose.msra.mxu0 %v1653
    %1659 = vmatprep.subr.mxu0 0.0
    %1660 = vmatpush1.xpose.msra.mxu0 %v1655
    %1661 = vmatprep.subr.mxu0 0.0
    %1662 = vmatpush1.xpose.msra.mxu0 0.0
    %1663 = vmatprep.subr.mxu0 0.0
    %1664 = vmatpush1.xpose.msra.mxu0 0.0
    %1665 = vmatprep.subr.mxu0 0.0
    %1666 = vmatpush1.xpose.msra.mxu0 0.0
    %1667 = vmatprep.subr.mxu0 0.0
    %1668 = vmatpush1.xpose.msra.mxu0 0.0
    %1669 = vmatprep.subr.mxu0 0.0
    %1670 = vmatpush1.xpose.msra.mxu0 0.0
    %1671 = vmatprep.subr.mxu0 0.0
    %1672 = vmatpush1.xpose.msra.mxu0 0.0
    %1673 = vmatprep.subr.mxu0 0.0
    %1674 = vmatpush1.xpose.msra.mxu0 0.0
    %1675 = vmatprep.subr.mxu0 0.0
    %1676 = vmatpush1.xpose.msra.mxu0 0.0
    %1677 = vmatprep.subr.mxu0 0.0
    %1678 = vmatpush1.xpose.msra.mxu0 0.0
    %1679 = vmatprep.subr.mxu0 0.0
    %1680 = vmatpush1.xpose.msra.mxu0 0.0
    %1681 = vmatprep.subr.mxu0 0.0
    %1682 = vmatpush1.xpose.msra.mxu0 0.0
    %1683 = vmatprep.subr.mxu0 0.0
    %1684 = vmatpush1.xpose.msra.mxu0 0.0
    %1685 = vmatprep.subr.mxu0 0.0
    %1686 = vmatpush1.xpose.msra.mxu0 0.0
    %1687 = vmatprep.subr.mxu0 0.0
    %1688 = vmatpush1.xpose.msra.mxu0 0.0
    %1689 = vmatprep.subr.mxu0 0.0
    %1690 = vmatpush1.xpose.msra.mxu0 0.0
    %1691 = vmatprep.subr.mxu0 0.0
    %1692 = vmatpush1.xpose.msra.mxu0 0.0
    %1693 = vmatprep.subr.mxu0 0.0
    %1694 = vmatpush1.xpose.msra.mxu0 0.0
    %1695 = vmatprep.subr.mxu0 0.0
    %1696 = vmatpush1.xpose.msra.mxu0 0.0
    %1697 = vmatprep.subr.mxu0 0.0
    %1698 = vmatpush1.xpose.msra.mxu0 0.0
    %1699 = vmatprep.subr.mxu0 0.0
    %1700 = vmatpush1.xpose.msra.mxu0 0.0
    %1701 = vmatprep.subr.mxu0 0.0
    %1702 = vmatpush1.xpose.msra.mxu0 0.0
    %1703 = vmatprep.subr.mxu0 0.0
    %1704 = vmatpush1.xpose.msra.mxu0 0.0
    %1705 = vmatprep.subr.mxu0 0.0
    %1706 = vmatpush1.xpose.msra.mxu0 0.0
    %1707 = vmatprep.subr.mxu0 0.0
    %1708 = vmatpush1.xpose.msra.mxu0 0.0
    %1709 = vmatprep.subr.mxu0 0.0
    %1710 = vmatpush1.xpose.msra.mxu0 0.0
    %1711 = vmatprep.subr.mxu0 0.0
    %1712 = vmatpush1.xpose.msra.mxu0 0.0
    %1713 = vmatprep.subr.mxu0 0.0
    %1714 = vmatpush1.xpose.msra.mxu0 0.0
    %1715 = vmatprep.subr.mxu0 0.0
    %1716 = vmatpush1.xpose.msra.mxu0 0.0
    %1717 = vmatprep.subr.mxu0 0.0
    %1718 = vmatpush1.xpose.msra.mxu0 0.0
    %1719 = vmatprep.subr.mxu0 0.0
    %1720 = vmatpush1.xpose.msra.mxu0 0.0
    %1721 = vmatprep.mubr.f32.mxu0 0.0
    %1722 = vmatmul.mubr.f32.gmra.mrb[0].mxu0 %v1649
    %v1723 = vpop.f32.mrb[0].mxu0
    %v1724 = vadd.f32 %v218, %v1723
    %v1725 = vpop.f32.mrb[0].mxu0
    %1726 = vmatprep.mubr.f32.mxu0 0.0
    %1727 = vmatmul.mubr.f32.gmra.mrb[0].mxu0 %v1651
    %v1728 = vpop.f32.mrb[0].mxu0
    %v1729 = vadd.f32 %v219, %v1728
    %v1730 = vpop.f32.mrb[0].mxu0
    %1731 = vdwg.mxu0
    %v1732 = vsel %vm318, %v1724, -inf
    %1733 = vmax.xlane.f32.xlu0 %v1732
    %v1734 = vpop.xlane.xlu0 %1733
    %v1735 = vsel %vm318, %v1729, -inf
    %1736 = vmax.xlane.f32.xlu0 %v1735
    %v1737 = vpop.xlane.xlu0 %1736
    %v1738 = vsub.f32 %v1724, %v1734
    %v1739 = vsub.f32 %v1729, %v1737
    %v1740 = vmul.f32 %v1738, 1.442695
    %v1741 = vpow.pop %v1740
    %v1742 = vmul.f32 %v1739, 1.442695
    %v1743 = vpow.pop %v1742
    %v1744 = vsel %vm318, %v1741, 0.0
    %1745 = vadd.xlane.f32.xlu0 %v1744
    %v1746 = vpop.xlane.xlu0 %1745
    %v1747 = vsel %vm318, %v1743, 0.0
    %1748 = vadd.xlane.f32.xlu0 %v1747
    %v1749 = vpop.xlane.xlu0 %1748
    %v1750 = vrcp.pop %v1746
    %v1751 = vrcp.pop %v1749
    %v1752 = vmul.f32 %v1741, %v1750
    %v1753 = vmul.f32 %v1743, %v1751
    %1756 = vrot.lane.b32.xlu0 %v179, 120
    %v1757 = vpop.permute.xlu0 %1756
    %1758 = vrot.lane.b32.xlu0 %v185, 120
    %v1759 = vpop.permute.xlu0 %1758
    %v1763 = vsel %vm318, %v1752, 0
    %v1766 = vsel %vm318, %v1753, 0
    %1768 = vmatprep.subr.mxu0 0.0
    %1769 = vmatpush1.msra.mxu0 %v1757
    %1770 = vmatprep.subr.mxu0 0.0
    %1771 = vmatpush1.msra.mxu0 %v1759
    %1772 = vmatprep.subr.mxu0 0.0
    %1773 = vmatpush1.msra.mxu0 0.0
    %1774 = vmatprep.subr.mxu0 0.0
    %1775 = vmatpush1.msra.mxu0 0.0
    %1776 = vmatprep.subr.mxu0 0.0
    %1777 = vmatpush1.msra.mxu0 0.0
    %1778 = vmatprep.subr.mxu0 0.0
    %1779 = vmatpush1.msra.mxu0 0.0
    %1780 = vmatprep.subr.mxu0 0.0
    %1781 = vmatpush1.msra.mxu0 0.0
    %1782 = vmatprep.subr.mxu0 0.0
    %1783 = vmatpush1.msra.mxu0 0.0
    %1784 = vmatprep.subr.mxu0 0.0
    %1785 = vmatpush1.msra.mxu0 0.0
    %1786 = vmatprep.subr.mxu0 0.0
    %1787 = vmatpush1.msra.mxu0 0.0
    %1788 = vmatprep.subr.mxu0 0.0
    %1789 = vmatpush1.msra.mxu0 0.0
    %1790 = vmatprep.subr.mxu0 0.0
    %1791 = vmatpush1.msra.mxu0 0.0
    %1792 = vmatprep.subr.mxu0 0.0
    %1793 = vmatpush1.msra.mxu0 0.0
    %1794 = vmatprep.subr.mxu0 0.0
    %1795 = vmatpush1.msra.mxu0 0.0
    %1796 = vmatprep.subr.mxu0 0.0
    %1797 = vmatpush1.msra.mxu0 0.0
    %1798 = vmatprep.subr.mxu0 0.0
    %1799 = vmatpush1.msra.mxu0 0.0
    %1800 = vmatprep.subr.mxu0 0.0
    %1801 = vmatpush1.msra.mxu0 0.0
    %1802 = vmatprep.subr.mxu0 0.0
    %1803 = vmatpush1.msra.mxu0 0.0
    %1804 = vmatprep.subr.mxu0 0.0
    %1805 = vmatpush1.msra.mxu0 0.0
    %1806 = vmatprep.subr.mxu0 0.0
    %1807 = vmatpush1.msra.mxu0 0.0
    %1808 = vmatprep.subr.mxu0 0.0
    %1809 = vmatpush1.msra.mxu0 0.0
    %1810 = vmatprep.subr.mxu0 0.0
    %1811 = vmatpush1.msra.mxu0 0.0
    %1812 = vmatprep.subr.mxu0 0.0
    %1813 = vmatpush1.msra.mxu0 0.0
    %1814 = vmatprep.subr.mxu0 0.0
    %1815 = vmatpush1.msra.mxu0 0.0
    %1816 = vmatprep.subr.mxu0 0.0
    %1817 = vmatpush1.msra.mxu0 0.0
    %1818 = vmatprep.subr.mxu0 0.0
    %1819 = vmatpush1.msra.mxu0 0.0
    %1820 = vmatprep.subr.mxu0 0.0
    %1821 = vmatpush1.msra.mxu0 0.0
    %1822 = vmatprep.subr.mxu0 0.0
    %1823 = vmatpush1.msra.mxu0 0.0
    %1824 = vmatprep.subr.mxu0 0.0
    %1825 = vmatpush1.msra.mxu0 0.0
    %1826 = vmatprep.subr.mxu0 0.0
    %1827 = vmatpush1.msra.mxu0 0.0
    %1828 = vmatprep.subr.mxu0 0.0
    %1829 = vmatpush1.msra.mxu0 0.0
    %1830 = vmatprep.subr.mxu0 0.0
    %1831 = vmatpush1.msra.mxu0 0.0
    %1832 = vmatprep.mubr.f32.mxu0 0.0
    %1833 = vmatmul.mubr.f32.gmra.mrb[0].mxu0 %v1763
    %v1834 = vpop.f32.mrb[0].mxu0
    %v1835 = vadd.f32 0.0, %v1834
    %v1836 = vpop.f32.mrb[0].mxu0
    %1837 = vmatprep.mubr.f32.mxu0 0.0
    %1838 = vmatmul.mubr.f32.gmra.mrb[0].mxu0 %v1766
    %v1839 = vpop.f32.mrb[0].mxu0
    %v1840 = vadd.f32 0.0, %v1839
    %v1841 = vpop.f32.mrb[0].mxu0
    %1842 = vdwg.mxu0
    %v1844 = vsel %vm232, %v1835, 0
    %v1847 = vsel %vm232, %v1840, 0
    %1849 = vmatprep.subr.mxu0 0.0
    %1850 = vmatpush1.msra.mxu0 %v225
    %1851 = vmatprep.subr.mxu0 0.0
    %1852 = vmatpush1.msra.mxu0 0.0
    %1853 = vmatprep.subr.mxu0 0.0
    %1854 = vmatpush1.msra.mxu0 0.0
    %1855 = vmatprep.subr.mxu0 0.0
    %1856 = vmatpush1.msra.mxu0 0.0
    %1857 = vmatprep.subr.mxu0 0.0
    %1858 = vmatpush1.msra.mxu0 0.0
    %1859 = vmatprep.subr.mxu0 0.0
    %1860 = vmatpush1.msra.mxu0 0.0
    %1861 = vmatprep.subr.mxu0 0.0
    %1862 = vmatpush1.msra.mxu0 0.0
    %1863 = vmatprep.subr.mxu0 0.0
    %1864 = vmatpush1.msra.mxu0 0.0
    %1865 = vmatprep.subr.mxu0 0.0
    %1866 = vmatpush1.msra.mxu0 0.0
    %1867 = vmatprep.subr.mxu0 0.0
    %1868 = vmatpush1.msra.mxu0 0.0
    %1869 = vmatprep.subr.mxu0 0.0
    %1870 = vmatpush1.msra.mxu0 0.0
    %1871 = vmatprep.subr.mxu0 0.0
    %1872 = vmatpush1.msra.mxu0 0.0
    %1873 = vmatprep.subr.mxu0 0.0
    %1874 = vmatpush1.msra.mxu0 0.0
    %1875 = vmatprep.subr.mxu0 0.0
    %1876 = vmatpush1.msra.mxu0 0.0
    %1877 = vmatprep.subr.mxu0 0.0
    %1878 = vmatpush1.msra.mxu0 0.0
    %1879 = vmatprep.subr.mxu0 0.0
    %1880 = vmatpush1.msra.mxu0 0.0
    %1881 = vmatprep.subr.mxu0 0.0
    %1882 = vmatpush1.msra.mxu0 0.0
    %1883 = vmatprep.subr.mxu0 0.0
    %1884 = vmatpush1.msra.mxu0 0.0
    %1885 = vmatprep.subr.mxu0 0.0
    %1886 = vmatpush1.msra.mxu0 0.0
    %1887 = vmatprep.subr.mxu0 0.0
    %1888 = vmatpush1.msra.mxu0 0.0
    %1889 = vmatprep.subr.mxu0 0.0
    %1890 = vmatpush1.msra.mxu0 0.0
    %1891 = vmatprep.subr.mxu0 0.0
    %1892 = vmatpush1.msra.mxu0 0.0
    %1893 = vmatprep.subr.mxu0 0.0
    %1894 = vmatpush1.msra.mxu0 0.0
    %1895 = vmatprep.subr.mxu0 0.0
    %1896 = vmatpush1.msra.mxu0 0.0
    %1897 = vmatprep.subr.mxu0 0.0
    %1898 = vmatpush1.msra.mxu0 0.0
    %1899 = vmatprep.subr.mxu0 0.0
    %1900 = vmatpush1.msra.mxu0 0.0
    %1901 = vmatprep.subr.mxu0 0.0
    %1902 = vmatpush1.msra.mxu0 0.0
    %1903 = vmatprep.subr.mxu0 0.0
    %1904 = vmatpush1.msra.mxu0 0.0
    %1905 = vmatprep.subr.mxu0 0.0
    %1906 = vmatpush1.msra.mxu0 0.0
    %1907 = vmatprep.subr.mxu0 0.0
    %1908 = vmatpush1.msra.mxu0 0.0
    %1909 = vmatprep.subr.mxu0 0.0
    %1910 = vmatpush1.msra.mxu0 0.0
    %1911 = vmatprep.subr.mxu0 0.0
    %1912 = vmatpush1.msra.mxu0 0.0
    %1913 = vmatprep.mubr.f32.mxu0 0.0
    %1914 = vmatmul.mubr.f32.gmra.mrb[0].mxu0 %v1844
    %v1915 = vpop.f32.mrb[0].mxu0
    %v1916 = vadd.f32 0.0, %v1915
    %v1917 = vpop.f32.mrb[0].mxu0
    %1918 = vmatprep.mubr.f32.mxu0 0.0
    %1919 = vmatmul.mubr.f32.gmra.mrb[0].mxu0 %v1847
    %v1920 = vpop.f32.mrb[0].mxu0
    %v1921 = vadd.f32 0.0, %v1920
    %v1922 = vpop.f32.mrb[0].mxu0
    %1923 = vdwg.mxu0
    %v1924 = vadd.f32 %v1639, %v1916
    %v1925 = vadd.f32 %v1640, %v1921
    %v1926 = vadd.f32 %v24, %v1924
    %v1927 = vadd.f32 %v25, %v1925
    %v1928 = vsel %vm28, %v1926, 0.0
    %1929 = vadd.xlane.f32.xlu0 %v1928
    %v1930 = vpop.xlane.xlu0 %1929
    %v1931 = vsel %vm28, %v1927, 0.0
    %1932 = vadd.xlane.f32.xlu0 %v1931
    %v1933 = vpop.xlane.xlu0 %1932
    %v1934 = vmul.f32 %v1930, %v35
    %v1935 = vmul.f32 %v1933, %v35
    %v1936 = vsub.f32 %v1926, %v1934
    %v1937 = vsub.f32 %v1927, %v1935
    %v1938 = vmul.f32 %v1936, %v1936
    %v1939 = vmul.f32 %v1937, %v1937
    %v1940 = vsel %vm28, %v1938, 0.0
    %1941 = vadd.xlane.f32.xlu0 %v1940
    %v1942 = vpop.xlane.xlu0 %1941
    %v1943 = vsel %vm28, %v1939, 0.0
    %1944 = vadd.xlane.f32.xlu0 %v1943
    %v1945 = vpop.xlane.xlu0 %1944
    %v1946 = vmul.f32 %v1942, 0.021276595
    %v1947 = vmul.f32 %v1945, 0.021276595
    %v1948 = vrsqrt.pop %v1946
    %v1949 = vmul.f32 %v1946, %v1948
    %vm1950 = vcmp.eq.f32.partialorder %v1946, inf
    %v1951 = vsel %vm1950, %v1946, %v1949
    %vm1952 = vcmp.eq.f32.partialorder %v1946, 0.0
    %v1953 = vand.u32 %v1946, 2147483648
    %v1954 = vsel %vm1952, %v1953, %v1951
    %v1955 = vrsqrt.pop %v1947
    %v1956 = vmul.f32 %v1947, %v1955
    %vm1957 = vcmp.eq.f32.partialorder %v1947, inf
    %v1958 = vsel %vm1957, %v1947, %v1956
    %vm1959 = vcmp.eq.f32.partialorder %v1947, 0.0
    %v1960 = vand.u32 %v1947, 2147483648
    %v1961 = vsel %vm1959, %v1960, %v1958
    %v1962 = vadd.f32 %v1954, 1e-12
    %v1963 = vadd.f32 %v1961, 1e-12
    %v1964 = vrcp.pop %v1962
    %v1965 = vmul.f32 1.0, %v1964
    %v1966 = vrcp.pop %v1963
    %v1967 = vmul.f32 1.0, %v1966
    %v1968 = vmul.f32 %v1936, %v1965
    %v1969 = vmul.f32 %v1937, %v1967
    %v1970 = vlaneseq
    %v1971 = vshrl.u32 %v1970, 7
    %v1972 = vsub.s32 6, %v1971
    %v1973 = vrot.slane %v26, %v1972
    %v1974 = vmul.f32 %v1973, %v1968
    %v1975 = vmul.f32 %v1973, %v1969
    %v1976 = vlaneseq
    %v1977 = vshrl.u32 %v1976, 7
    %v1978 = vsub.s32 7, %v1977
    %v1979 = vrot.slane %v26, %v1978
    %v1980 = vadd.f32 %v1974, %v1979
    %v1981 = vadd.f32 %v1975, %v1979
    %v1982 = vld [vmem:[%s3] sm:$0xff]
    %v1983 = vld [vmem:[%s3 + $0x8] sm:$0xff]
    %v1984 = vld [vmem:[%s3 + $0x10] sm:$0xff]
    %v1985 = vld [vmem:[%s3 + $0x18] sm:$0xff]
    %v1986 = vld [vmem:[%s3 + $0x20] sm:$0xff]
    %v1987 = vld [vmem:[%s3 + $0x28] sm:$0xff]
    %v1988 = vlaneseq
    %v1989 = vshrl.u32 %v1988, 7
    %v1990 = vsub.s32 1, %v1989
    %v1991 = vrot.slane %v26, %v1990
    %v1993 = vsel %vm28, %v1980, 0
    %v1996 = vsel %vm28, %v1981, 0
    %1998 = vmatprep.subr.mxu0 0.0
    %1999 = vmatpush1.msra.mxu0 %v1982
    %2000 = vmatprep.subr.mxu0 0.0
    %2001 = vmatpush1.msra.mxu0 %v1983
    %2002 = vmatprep.subr.mxu0 0.0
    %2003 = vmatpush1.msra.mxu0 %v1984
    %2004 = vmatprep.subr.mxu0 0.0
    %2005 = vmatpush1.msra.mxu0 %v1985
    %2006 = vmatprep.subr.mxu0 0.0
    %2007 = vmatpush1.msra.mxu0 %v1986
    %2008 = vmatprep.subr.mxu0 0.0
    %2009 = vmatpush1.msra.mxu0 %v1987
    %2010 = vmatprep.subr.mxu0 0.0
    %2011 = vmatpush1.msra.mxu0 0.0
    %2012 = vmatprep.subr.mxu0 0.0
    %2013 = vmatpush1.msra.mxu0 0.0
    %2014 = vmatprep.subr.mxu0 0.0
    %2015 = vmatpush1.msra.mxu0 0.0
    %2016 = vmatprep.subr.mxu0 0.0
    %2017 = vmatpush1.msra.mxu0 0.0
    %2018 = vmatprep.subr.mxu0 0.0
    %2019 = vmatpush1.msra.mxu0 0.0
    %2020 = vmatprep.subr.mxu0 0.0
    %2021 = vmatpush1.msra.mxu0 0.0
    %2022 = vmatprep.subr.mxu0 0.0
    %2023 = vmatpush1.msra.mxu0 0.0
    %2024 = vmatprep.subr.mxu0 0.0
    %2025 = vmatpush1.msra.mxu0 0.0
    %2026 = vmatprep.subr.mxu0 0.0
    %2027 = vmatpush1.msra.mxu0 0.0
    %2028 = vmatprep.subr.mxu0 0.0
    %2029 = vmatpush1.msra.mxu0 0.0
    %2030 = vmatprep.subr.mxu0 0.0
    %2031 = vmatpush1.msra.mxu0 0.0
    %2032 = vmatprep.subr.mxu0 0.0
    %2033 = vmatpush1.msra.mxu0 0.0
    %2034 = vmatprep.subr.mxu0 0.0
    %2035 = vmatpush1.msra.mxu0 0.0
    %2036 = vmatprep.subr.mxu0 0.0
    %2037 = vmatpush1.msra.mxu0 0.0
    %2038 = vmatprep.subr.mxu0 0.0
    %2039 = vmatpush1.msra.mxu0 0.0
    %2040 = vmatprep.subr.mxu0 0.0
    %2041 = vmatpush1.msra.mxu0 0.0
    %2042 = vmatprep.subr.mxu0 0.0
    %2043 = vmatpush1.msra.mxu0 0.0
    %2044 = vmatprep.subr.mxu0 0.0
    %2045 = vmatpush1.msra.mxu0 0.0
    %2046 = vmatprep.subr.mxu0 0.0
    %2047 = vmatpush1.msra.mxu0 0.0
    %2048 = vmatprep.subr.mxu0 0.0
    %2049 = vmatpush1.msra.mxu0 0.0
    %2050 = vmatprep.subr.mxu0 0.0
    %2051 = vmatpush1.msra.mxu0 0.0
    %2052 = vmatprep.subr.mxu0 0.0
    %2053 = vmatpush1.msra.mxu0 0.0
    %2054 = vmatprep.subr.mxu0 0.0
    %2055 = vmatpush1.msra.mxu0 0.0
    %2056 = vmatprep.subr.mxu0 0.0
    %2057 = vmatpush1.msra.mxu0 0.0
    %2058 = vmatprep.subr.mxu0 0.0
    %2059 = vmatpush1.msra.mxu0 0.0
    %2060 = vmatprep.subr.mxu0 0.0
    %2061 = vmatpush1.msra.mxu0 0.0
    %2062 = vmatprep.mubr.f32.mxu0 0.0
    %2063 = vmatmul.mubr.f32.gmra.mrb[0].mxu0 %v1993
    %v2064 = vpop.f32.mrb[0].mxu0
    %v2065 = vadd.f32 %v1991, %v2064
    %v2066 = vpop.f32.mrb[0].mxu0
    %2067 = vmatprep.mubr.f32.mxu0 0.0
    %2068 = vmatmul.mubr.f32.gmra.mrb[0].mxu0 %v1996
    %v2069 = vpop.f32.mrb[0].mxu0
    %v2070 = vadd.f32 %v1991, %v2069
    %v2071 = vpop.f32.mrb[0].mxu0
    %2072 = vdwg.mxu0
    %v2073 = vmul.f32 %v2065, 0.5
    %v2074 = vmul.f32 %v2070, 0.5
    %v2075 = vmul.f32 %v2065, 0.044715
    %v2076 = vmul.f32 %v2070, 0.044715
    %v2077 = vmul.f32 %v2075, %v2065
    %v2078 = vmul.f32 %v2076, %v2070
    %v2079 = vmul.f32 %v2077, %v2065
    %v2080 = vmul.f32 %v2078, %v2070
    %v2081 = vadd.f32 %v2065, %v2079
    %v2082 = vadd.f32 %v2070, %v2080
    %v2083 = vmul.f32 %v2081, 0.7978846
    %v2084 = vmul.f32 %v2082, 0.7978846
    %v2085 = vtanh.pop %v2083
    %v2086 = vtanh.pop %v2084
    %v2087 = vadd.f32 %v2085, 1.0
    %v2088 = vadd.f32 %v2086, 1.0
    %v2089 = vmul.f32 %v2073, %v2087
    %v2090 = vmul.f32 %v2074, %v2088
    %v2091 = vld [vmem:[%s4] sm:$0xff]
    %v2092 = vld [vmem:[%s4 + $0x8] sm:$0xff]
    %v2093 = vld [vmem:[%s4 + $0x10] sm:$0xff]
    %v2094 = vld [vmem:[%s4 + $0x18] sm:$0xff]
    %v2095 = vld [vmem:[%s4 + $0x20] sm:$0xff]
    %v2096 = vld [vmem:[%s4 + $0x28] sm:$0xff]
    %v2097 = vld [vmem:[%s4 + $0x30] sm:$0xff]
    %v2098 = vld [vmem:[%s4 + $0x38] sm:$0xff]
    %v2099 = vld [vmem:[%s4 + $0x40] sm:$0xff]
    %v2100 = vld [vmem:[%s4 + $0x48] sm:$0xff]
    %v2101 = vld [vmem:[%s4 + $0x50] sm:$0xff]
    %v2102 = vld [vmem:[%s4 + $0x58] sm:$0xff]
    %v2103 = vlaneseq
    %v2104 = vshrl.u32 %v2103, 7
    %v2105 = vsub.s32 3, %v2104
    %v2106 = vrot.slane %v26, %v2105
    %vm2107 = vcmask 785408
    %v2109 = vsel %vm2107, %v2089, 0
    %v2112 = vsel %vm2107, %v2090, 0
    %2114 = vmatprep.subr.mxu0 0.0
    %2115 = vmatpush1.msra.mxu0 %v2091
    %2116 = vmatprep.subr.mxu0 0.0
    %2117 = vmatpush1.msra.mxu0 %v2092
    %2118 = vmatprep.subr.mxu0 0.0
    %2119 = vmatpush1.msra.mxu0 %v2093
    %2120 = vmatprep.subr.mxu0 0.0
    %2121 = vmatpush1.msra.mxu0 %v2094
    %2122 = vmatprep.subr.mxu0 0.0
    %2123 = vmatpush1.msra.mxu0 %v2095
    %2124 = vmatprep.subr.mxu0 0.0
    %2125 = vmatpush1.msra.mxu0 %v2096
    %2126 = vmatprep.subr.mxu0 0.0
    %2127 = vmatpush1.msra.mxu0 %v2097
    %2128 = vmatprep.subr.mxu0 0.0
    %2129 = vmatpush1.msra.mxu0 %v2098
    %2130 = vmatprep.subr.mxu0 0.0
    %2131 = vmatpush1.msra.mxu0 %v2099
    %2132 = vmatprep.subr.mxu0 0.0
    %2133 = vmatpush1.msra.mxu0 %v2100
    %2134 = vmatprep.subr.mxu0 0.0
    %2135 = vmatpush1.msra.mxu0 %v2101
    %2136 = vmatprep.subr.mxu0 0.0
    %2137 = vmatpush1.msra.mxu0 %v2102
    %2138 = vmatprep.subr.mxu0 0.0
    %2139 = vmatpush1.msra.mxu0 0.0
    %2140 = vmatprep.subr.mxu0 0.0
    %2141 = vmatpush1.msra.mxu0 0.0
    %2142 = vmatprep.subr.mxu0 0.0
    %2143 = vmatpush1.msra.mxu0 0.0
    %2144 = vmatprep.subr.mxu0 0.0
    %2145 = vmatpush1.msra.mxu0 0.0
    %2146 = vmatprep.subr.mxu0 0.0
    %2147 = vmatpush1.msra.mxu0 0.0
    %2148 = vmatprep.subr.mxu0 0.0
    %2149 = vmatpush1.msra.mxu0 0.0
    %2150 = vmatprep.subr.mxu0 0.0
    %2151 = vmatpush1.msra.mxu0 0.0
    %2152 = vmatprep.subr.mxu0 0.0
    %2153 = vmatpush1.msra.mxu0 0.0
    %2154 = vmatprep.subr.mxu0 0.0
    %2155 = vmatpush1.msra.mxu0 0.0
    %2156 = vmatprep.subr.mxu0 0.0
    %2157 = vmatpush1.msra.mxu0 0.0
    %2158 = vmatprep.subr.mxu0 0.0
    %2159 = vmatpush1.msra.mxu0 0.0
    %2160 = vmatprep.subr.mxu0 0.0
    %2161 = vmatpush1.msra.mxu0 0.0
    %2162 = vmatprep.subr.mxu0 0.0
    %2163 = vmatpush1.msra.mxu0 0.0
    %2164 = vmatprep.subr.mxu0 0.0
    %2165 = vmatpush1.msra.mxu0 0.0
    %2166 = vmatprep.subr.mxu0 0.0
    %2167 = vmatpush1.msra.mxu0 0.0
    %2168 = vmatprep.subr.mxu0 0.0
    %2169 = vmatpush1.msra.mxu0 0.0
    %2170 = vmatprep.subr.mxu0 0.0
    %2171 = vmatpush1.msra.mxu0 0.0
    %2172 = vmatprep.subr.mxu0 0.0
    %2173 = vmatpush1.msra.mxu0 0.0
    %2174 = vmatprep.subr.mxu0 0.0
    %2175 = vmatpush1.msra.mxu0 0.0
    %2176 = vmatprep.subr.mxu0 0.0
    %2177 = vmatpush1.msra.mxu0 0.0
    %2178 = vmatprep.mubr.f32.mxu0 0.0
    %2179 = vmatmul.mubr.f32.gmra.mrb[0].mxu0 %v2109
    %v2180 = vpop.f32.mrb[0].mxu0
    %v2181 = vadd.f32 %v2106, %v2180
    %v2182 = vpop.f32.mrb[0].mxu0
    %2183 = vmatprep.mubr.f32.mxu0 0.0
    %2184 = vmatmul.mubr.f32.gmra.mrb[0].mxu0 %v2112
    %v2185 = vpop.f32.mrb[0].mxu0
    %v2186 = vadd.f32 %v2106, %v2185
    %v2187 = vpop.f32.mrb[0].mxu0
    %2188 = vdwg.mxu0
    %v2189 = vadd.f32 %v1926, %v2181
    %v2190 = vadd.f32 %v1927, %v2186
    %2191 = vst.msk [vmem:[#allocation2] sm:$0xff] %vm28, %v2189
    %2192 = vst.msk [vmem:[#allocation2 + $0x8] sm:$0xff] %vm28, %v2190
    // Predicated region
    $region26: #{transformer_block.1} parent=1 // pred_check
      _
    $region27: #{transformer_block.1} parent=1 // pred_check_branch
      %2194 = sbr.rel (0) target = $region29
    $region28: #{transformer_block.1} parent=1 // pred_region
      %s2196 = ssub.s32 256, 256
      %2197 = vsyncadd [#allocation3], %s2196
      %s2198 = sshll.u32 [#allocation2], 4
      %s2199 = int_to_ptr.vmem [resolvable:$true] %s2198
      %2204 = dma.vmem_to_hbm [thread:$0]  %s2199, 256, %s6, [#allocation3], 128, 128, 8
    $region29: #{transformer_block.1} parent=1 // pred_fallthru
      _
    // Predicated region
    $region30: #{transformer_block.1} parent=1 // pred_check
      _
    $region31: #{transformer_block.1} parent=1 // pred_check_branch
      %2206 = sbr.rel (0) target = $region33
    $region32: #{transformer_block.1} parent=1 // pred_region
      %2207 = dma.done [#allocation3], 256
    $region33: #{transformer_block.1} parent=1 // pred_fallthru
      _
    %2208 = vsyncpa [#allocation3], 1

</llo_original>
